<compile_context>
chip_gen: v6e
topology: v6e:2x2x1
jax: 0.10.0
libtpu: 0.0.40
codegen_flags: <defaults>
</compile_context>

<pallas_src>
import functools

import jax
import jax.numpy as jnp
from jax.experimental import pallas as pl
from jax.experimental.pallas import tpu as pltpu

INPUT_DIM = 28
OUTPUT_DIM = 21
LAYER_SIZE = 64
NUM_HIDDEN_LAYERS = 10   # (Linear, ReLU) blocks after the first one

IN_PAD = 32              # 28 -> 32 (unmasked x loads)
OUT_PAD = 32             # 21 -> 32 per packed row-group (lane-dense stores)
PACK = 4                 # rows packed per vreg-row; 64*4=256 lanes fills the
                         # v6e/v7x MXU and is lane-dense everywhere (use 2 on v5e)
BATCH_TILE = 2048        # rows per grid step (clamped / split for small batches)


def _round_up(n, m):
    return (n + m - 1) // m * m


def _mlp_kernel(x_ref, w0_ref, b0_ref, wh_ref, bh_ref, wo_ref, bo_ref, o_ref,
                *, act_dtype):
    wdtype = w0_ref.dtype  # weights may be bf16; biases/accumulation stay f32

    # First layer: (T/P, 32P) @ (32P, 64P) + (1, 64P), ReLU
    h = jnp.dot(x_ref[...].astype(wdtype), w0_ref[...],
                preferred_element_type=jnp.float32)
    h = jnp.maximum(h + b0_ref[...], 0.0).astype(act_dtype)

    # Hidden stack: 10 x [(T/P, 64P) @ (64P, 64P) + (1, 64P), ReLU]
    for k in range(NUM_HIDDEN_LAYERS):
        h = jnp.dot(h.astype(wdtype), wh_ref[k],
                    preferred_element_type=jnp.float32)
        h = jnp.maximum(h + bh_ref[k], 0.0).astype(act_dtype)

    # Output layer: (T/P, 64P) @ (64P, 32P) + (1, 32P), Sigmoid.
    # exp and reciprocal both go to the (otherwise idle) EUP slot.
    z = jnp.dot(h.astype(wdtype), wo_ref[...],
                preferred_element_type=jnp.float32) + bo_ref[...]
    o_ref[...] = pl.reciprocal(1.0 + jnp.exp(-z), approx=True).astype(o_ref.dtype)


def _choose_tile(batch, batch_tile, pack):
    """Pick rows-per-grid-step: large tiles, even (>=2) step count when possible."""
    align = 8 * pack                      # packed sublane alignment
    b_al = _round_up(batch, align)
    batch_tile = _round_up(batch_tile, align)
    n_steps = max(1, pl.cdiv(b_al, batch_tile))
    if b_al >= 2 * align and n_steps % 2 == 1:
        n_steps += 1                      # even #steps keeps both v7x TCs busy
    n_steps = min(n_steps, b_al // align)
    tile = _round_up(pl.cdiv(b_al, n_steps), align)
    b_pad = _round_up(b_al, tile)
    return tile, b_pad


@functools.partial(jax.jit,
                   static_argnames=("batch_tile", "pack", "act_dtype", "out_dtype"))
def mlp_forward(x, params, *, batch_tile=BATCH_TILE, pack=PACK,
                act_dtype=jnp.float32, out_dtype=jnp.float32):
    w0, b0, wh, bh, wo, bo = params
    B = x.shape[0]
    P = pack
    tile, b_pad = _choose_tile(B, batch_tile, P)
    grid = (b_pad // tile,)

    # ---- lane packing (cheap wrapper-side prep) -------------------------------
    # P consecutive rows share one packed row; weights become block-diagonal so
    # each layer is a single dense (64P x 64P) matmul and all elementwise work
    # is lane-dense.  Padded K / output lanes are zero.
    wdt = w0.dtype
    eye = jnp.eye(P, dtype=wdt)
    w0_big = jnp.kron(eye, jnp.pad(w0, ((0, IN_PAD - INPUT_DIM), (0, 0))))      # (32P, 64P)
    wh_big = jax.vmap(lambda w: jnp.kron(eye, w))(wh)                            # (L, 64P, 64P)
    wo_big = jnp.kron(eye, jnp.pad(wo, ((0, 0), (0, OUT_PAD - OUTPUT_DIM))))     # (64P, 32P)
    b0_big = jnp.tile(b0, (1, P))                                                # (1, 64P)
    bh_big = jnp.tile(bh, (1, 1, P))                                             # (L, 1, 64P)
    bo_big = jnp.tile(jnp.pad(bo, ((0, 0), (0, OUT_PAD - OUTPUT_DIM))), (1, P))  # (1, 32P)

    # Zero-padded rows are harmless (sliced off); packed x tile is 128 lanes wide.
    x_p = jnp.pad(x.astype(jnp.float32),
                  ((0, b_pad - B), (0, IN_PAD - INPUT_DIM)))
    x_packed = x_p.reshape(b_pad // P, P * IN_PAD)

    def const_spec(shape):
        # Re-used every grid step: single-buffer (no redundant warm-up DMA).
        return pl.BlockSpec(shape, lambda i: (0,) * len(shape),
                            pipeline_mode=pl.Buffered(1))

    flops = 2 * (b_pad // P) * (P * IN_PAD * P * LAYER_SIZE
                                + NUM_HIDDEN_LAYERS * (P * LAYER_SIZE) ** 2
                                + P * LAYER_SIZE * P * OUT_PAD)
    wbytes = ((w0_big.size + wh_big.size + wo_big.size) * w0_big.dtype.itemsize
              + (b0_big.size + bh_big.size + bo_big.size) * 4)
    cost = pl.CostEstimate(
        flops=flops,
        transcendentals=2 * b_pad * OUT_PAD,
        bytes_accessed=b_pad * IN_PAD * 4 + b_pad * OUT_PAD * 4 + wbytes,
    )

    out = pl.pallas_call(
        functools.partial(_mlp_kernel, act_dtype=act_dtype),
        out_shape=jax.ShapeDtypeStruct((b_pad // P, P * OUT_PAD), out_dtype),
        grid_spec=pltpu.PrefetchScalarGridSpec(
            num_scalar_prefetch=0,
            grid=grid,
            in_specs=[
                pl.BlockSpec((tile // P, P * IN_PAD), lambda i: (i, 0)),  # x tile
                const_spec(w0_big.shape),   # (32P, 64P)
                const_spec(b0_big.shape),   # (1, 64P)
                const_spec(wh_big.shape),   # (10, 64P, 64P)
                const_spec(bh_big.shape),   # (10, 1, 64P)
                const_spec(wo_big.shape),   # (64P, 32P)
                const_spec(bo_big.shape),   # (1, 32P)
            ],
            out_specs=pl.BlockSpec((tile // P, P * OUT_PAD), lambda i: (i, 0)),
        ),
        compiler_params=pltpu.CompilerParams(
            dimension_semantics=("parallel",)),
        cost_estimate=cost,
    )(x_packed, w0_big, b0_big, wh_big, bh_big, wo_big, bo_big)

    # Unpack: (b_pad/P, P*32) -> (b_pad, 32) is a contiguous (free) reshape; the
    # slice is the only per-row copy left (32 lanes/row instead of 128).
    return out.reshape(b_pad, OUT_PAD)[:B, :OUTPUT_DIM]


def init_params(key, weight_dtype=jnp.float32):
    """Deterministic init mirroring nn.Linear shapes.

    Weights are kept pre-transposed as (in, out); biases are always f32;
    weights may be bf16 (native MXU rate on every TPU generation).
    """
    ks = jax.random.split(key, 6)
    s0 = 1.0 / jnp.sqrt(INPUT_DIM)
    sh = 1.0 / jnp.sqrt(LAYER_SIZE)
    w0 = jax.random.uniform(ks[0], (INPUT_DIM, LAYER_SIZE), jnp.float32, -s0, s0)
    b0 = jax.random.uniform(ks[1], (1, LAYER_SIZE), jnp.float32, -s0, s0)
    wh = jax.random.uniform(ks[2], (NUM_HIDDEN_LAYERS, LAYER_SIZE, LAYER_SIZE),
                            jnp.float32, -sh, sh)
    bh = jax.random.uniform(ks[3], (NUM_HIDDEN_LAYERS, 1, LAYER_SIZE),
                            jnp.float32, -sh, sh)
    wo = jax.random.uniform(ks[4], (LAYER_SIZE, OUTPUT_DIM), jnp.float32, -sh, sh)
    bo = jax.random.uniform(ks[5], (1, OUTPUT_DIM), jnp.float32, -sh, sh)
    cast = lambda w: w.astype(weight_dtype)
    return (cast(w0), b0, cast(wh), bh, cast(wo), bo)


def mlp_reference(x, params):
    """Pure-JAX reference of the PyTorch forward pass (mirrors weight casting)."""
    w0, b0, wh, bh, wo, bo = params
    dt = w0.dtype
    h = jnp.dot(x.astype(dt), w0, preferred_element_type=jnp.float32) + b0
    h = jnp.maximum(h, 0.0)
    for k in range(NUM_HIDDEN_LAYERS):
        h = jnp.dot(h.astype(dt), wh[k], preferred_element_type=jnp.float32) + bh[k]
        h = jnp.maximum(h, 0.0)
    z = jnp.dot(h.astype(dt), wo, preferred_element_type=jnp.float32) + bo
    return jax.nn.sigmoid(z)


if __name__ == "__main__":
    key = jax.random.PRNGKey(0)
    kx1, kx2, kx3, kp = jax.random.split(key, 4)

    # 1) Small batch, f32 params. Tolerance allows the EUP approx-reciprocal
    #    in the sigmoid (outputs are in [0,1], so atol dominates).
    params_f32 = init_params(kp, jnp.float32)
    x1 = jax.random.normal(kx1, (8, INPUT_DIM), jnp.float32)
    out1 = jax.block_until_ready(mlp_forward(x1, params_f32))
    ref1 = mlp_reference(x1, params_f32)
    assert out1.shape == (8, OUTPUT_DIM)
    assert jnp.allclose(out1, ref1, atol=2e-3, rtol=0), "f32 small-batch mismatch"

    # 2) Batch not a multiple of the alignment -> row padding + 2-step grid.
    x2 = jax.random.normal(kx2, (300, INPUT_DIM), jnp.float32)
    out2 = jax.block_until_ready(mlp_forward(x2, params_f32))
    ref2 = mlp_reference(x2, params_f32)
    assert out2.shape == (300, OUTPUT_DIM)
    assert jnp.allclose(out2, ref2, atol=2e-3, rtol=0), "f32 tiled-batch mismatch"

    # 3) bf16 weights + bf16 inter-layer activations (v6e/v7x fast path).
    params_bf16 = init_params(kp, jnp.bfloat16)
    x3 = jax.random.normal(kx3, (64, INPUT_DIM), jnp.float32)
    out3 = jax.block_until_ready(
        mlp_forward(x3, params_bf16, act_dtype=jnp.bfloat16))
    ref3 = mlp_reference(x3, params_bf16)
    assert out3.shape == (64, OUTPUT_DIM)
    assert jnp.allclose(out3, ref3, atol=3e-2, rtol=0), "bf16 mismatch"

    print("KERNEL_OK")
</pallas_src>

<mosaic_0001>
module attributes {stable_mosaic.version = 11 : i64} {
  func.func @_mlp_kernel(%arg0: i32, %arg1: memref<8x128xf32, #tpu.memory_space<vmem>>, %arg2: memref<128x256xf32, #tpu.memory_space<vmem>>, %arg3: memref<1x256xf32, #tpu.memory_space<vmem>>, %arg4: memref<10x256x256xf32, #tpu.memory_space<vmem>>, %arg5: memref<10x1x256xf32, #tpu.memory_space<vmem>>, %arg6: memref<256x128xf32, #tpu.memory_space<vmem>>, %arg7: memref<1x128xf32, #tpu.memory_space<vmem>>, %arg8: memref<8x128xf32, #tpu.memory_space<vmem>>) attributes {dimension_semantics = [#tpu.dimension_semantics<parallel>], iteration_bounds = array<i64: 1>, scalar_prefetch = 0 : i64, scratch_operands = 0 : i64, tpu.core_type = #tpu.core_type<tc>, window_params = [{transform_indices = @transform_0, window_bounds = array<i64: 8, 128>}, {pipeline_mode = #tpu.pipeline_mode<synchronous>, transform_indices = @transform_1, window_bounds = array<i64: 128, 256>}, {pipeline_mode = #tpu.pipeline_mode<synchronous>, transform_indices = @transform_2, window_bounds = array<i64: 1, 256>}, {pipeline_mode = #tpu.pipeline_mode<synchronous>, transform_indices = @transform_3, window_bounds = array<i64: 10, 256, 256>}, {pipeline_mode = #tpu.pipeline_mode<synchronous>, transform_indices = @transform_4, window_bounds = array<i64: 10, 1, 256>}, {pipeline_mode = #tpu.pipeline_mode<synchronous>, transform_indices = @transform_5, window_bounds = array<i64: 256, 128>}, {pipeline_mode = #tpu.pipeline_mode<synchronous>, transform_indices = @transform_6, window_bounds = array<i64: 1, 128>}, {transform_indices = @transform_7, window_bounds = array<i64: 8, 128>}]} {
    %c0 = arith.constant 0 : index
    %c0_0 = arith.constant 0 : index
    %0 = vector.load %arg1[%c0, %c0_0] : memref<8x128xf32, #tpu.memory_space<vmem>>, vector<8x128xf32>
    %c0_1 = arith.constant 0 : index
    %c0_2 = arith.constant 0 : index
    %1 = vector.load %arg2[%c0_1, %c0_2] : memref<128x256xf32, #tpu.memory_space<vmem>>, vector<128x256xf32>
    %cst = arith.constant dense<0.000000e+00> : vector<8x256xf32>
    %2 = tpu.matmul %0, %1, %cst {dimension_numbers = #tpu.dot_dimension_numbers<[1], [0], [0], [1], [0, 0, 1, 1], [], []>} : vector<8x128xf32>, vector<128x256xf32>, vector<8x256xf32> -> vector<8x256xf32>
    %c0_3 = arith.constant 0 : index
    %c0_4 = arith.constant 0 : index
    %3 = vector.load %arg3[%c0_3, %c0_4] : memref<1x256xf32, #tpu.memory_space<vmem>>, vector<1x256xf32>
    %4 = vector.broadcast %3 : vector<1x256xf32> to vector<8x256xf32>
    %5 = arith.addf %2, %4 : vector<8x256xf32>
    %cst_5 = arith.constant 0.000000e+00 : f32
    %6 = vector.broadcast %cst_5 : f32 to vector<8x256xf32>
    %7 = arith.maximumf %5, %6 : vector<8x256xf32>
    %c0_6 = arith.constant 0 : index
    %c0_7 = arith.constant 0 : index
    %c0_8 = arith.constant 0 : index
    %8 = vector.load %arg4[%c0_6, %c0_7, %c0_8] : memref<10x256x256xf32, #tpu.memory_space<vmem>>, vector<1x256x256xf32>
    %9 = vector.shape_cast %8 : vector<1x256x256xf32> to vector<256x256xf32>
    %cst_9 = arith.constant dense<0.000000e+00> : vector<8x256xf32>
    %10 = tpu.matmul %7, %9, %cst_9 {dimension_numbers = #tpu.dot_dimension_numbers<[1], [0], [0], [1], [0, 0, 1, 1], [], []>} : vector<8x256xf32>, vector<256x256xf32>, vector<8x256xf32> -> vector<8x256xf32>
    %c0_10 = arith.constant 0 : index
    %c0_11 = arith.constant 0 : index
    %c0_12 = arith.constant 0 : index
    %11 = vector.load %arg5[%c0_10, %c0_11, %c0_12] : memref<10x1x256xf32, #tpu.memory_space<vmem>>, vector<1x1x256xf32>
    %12 = vector.shape_cast %11 : vector<1x1x256xf32> to vector<1x256xf32>
    %13 = vector.broadcast %12 : vector<1x256xf32> to vector<8x256xf32>
    %14 = arith.addf %10, %13 : vector<8x256xf32>
    %cst_13 = arith.constant 0.000000e+00 : f32
    %15 = vector.broadcast %cst_13 : f32 to vector<8x256xf32>
    %16 = arith.maximumf %14, %15 : vector<8x256xf32>
    %c1 = arith.constant 1 : index
    %c0_14 = arith.constant 0 : index
    %c0_15 = arith.constant 0 : index
    %17 = vector.load %arg4[%c1, %c0_14, %c0_15] : memref<10x256x256xf32, #tpu.memory_space<vmem>>, vector<1x256x256xf32>
    %18 = vector.shape_cast %17 : vector<1x256x256xf32> to vector<256x256xf32>
    %cst_16 = arith.constant dense<0.000000e+00> : vector<8x256xf32>
    %19 = tpu.matmul %16, %18, %cst_16 {dimension_numbers = #tpu.dot_dimension_numbers<[1], [0], [0], [1], [0, 0, 1, 1], [], []>} : vector<8x256xf32>, vector<256x256xf32>, vector<8x256xf32> -> vector<8x256xf32>
    %c1_17 = arith.constant 1 : index
    %c0_18 = arith.constant 0 : index
    %c0_19 = arith.constant 0 : index
    %20 = vector.load %arg5[%c1_17, %c0_18, %c0_19] : memref<10x1x256xf32, #tpu.memory_space<vmem>>, vector<1x1x256xf32>
    %21 = vector.shape_cast %20 : vector<1x1x256xf32> to vector<1x256xf32>
    %22 = vector.broadcast %21 : vector<1x256xf32> to vector<8x256xf32>
    %23 = arith.addf %19, %22 : vector<8x256xf32>
    %cst_20 = arith.constant 0.000000e+00 : f32
    %24 = vector.broadcast %cst_20 : f32 to vector<8x256xf32>
    %25 = arith.maximumf %23, %24 : vector<8x256xf32>
    %c2 = arith.constant 2 : index
    %c0_21 = arith.constant 0 : index
    %c0_22 = arith.constant 0 : index
    %26 = vector.load %arg4[%c2, %c0_21, %c0_22] : memref<10x256x256xf32, #tpu.memory_space<vmem>>, vector<1x256x256xf32>
    %27 = vector.shape_cast %26 : vector<1x256x256xf32> to vector<256x256xf32>
    %cst_23 = arith.constant dense<0.000000e+00> : vector<8x256xf32>
    %28 = tpu.matmul %25, %27, %cst_23 {dimension_numbers = #tpu.dot_dimension_numbers<[1], [0], [0], [1], [0, 0, 1, 1], [], []>} : vector<8x256xf32>, vector<256x256xf32>, vector<8x256xf32> -> vector<8x256xf32>
    %c2_24 = arith.constant 2 : index
    %c0_25 = arith.constant 0 : index
    %c0_26 = arith.constant 0 : index
    %29 = vector.load %arg5[%c2_24, %c0_25, %c0_26] : memref<10x1x256xf32, #tpu.memory_space<vmem>>, vector<1x1x256xf32>
    %30 = vector.shape_cast %29 : vector<1x1x256xf32> to vector<1x256xf32>
    %31 = vector.broadcast %30 : vector<1x256xf32> to vector<8x256xf32>
    %32 = arith.addf %28, %31 : vector<8x256xf32>
    %cst_27 = arith.constant 0.000000e+00 : f32
    %33 = vector.broadcast %cst_27 : f32 to vector<8x256xf32>
    %34 = arith.maximumf %32, %33 : vector<8x256xf32>
    %c3 = arith.constant 3 : index
    %c0_28 = arith.constant 0 : index
    %c0_29 = arith.constant 0 : index
    %35 = vector.load %arg4[%c3, %c0_28, %c0_29] : memref<10x256x256xf32, #tpu.memory_space<vmem>>, vector<1x256x256xf32>
    %36 = vector.shape_cast %35 : vector<1x256x256xf32> to vector<256x256xf32>
    %cst_30 = arith.constant dense<0.000000e+00> : vector<8x256xf32>
    %37 = tpu.matmul %34, %36, %cst_30 {dimension_numbers = #tpu.dot_dimension_numbers<[1], [0], [0], [1], [0, 0, 1, 1], [], []>} : vector<8x256xf32>, vector<256x256xf32>, vector<8x256xf32> -> vector<8x256xf32>
    %c3_31 = arith.constant 3 : index
    %c0_32 = arith.constant 0 : index
    %c0_33 = arith.constant 0 : index
    %38 = vector.load %arg5[%c3_31, %c0_32, %c0_33] : memref<10x1x256xf32, #tpu.memory_space<vmem>>, vector<1x1x256xf32>
    %39 = vector.shape_cast %38 : vector<1x1x256xf32> to vector<1x256xf32>
    %40 = vector.broadcast %39 : vector<1x256xf32> to vector<8x256xf32>
    %41 = arith.addf %37, %40 : vector<8x256xf32>
    %cst_34 = arith.constant 0.000000e+00 : f32
    %42 = vector.broadcast %cst_34 : f32 to vector<8x256xf32>
    %43 = arith.maximumf %41, %42 : vector<8x256xf32>
    %c4 = arith.constant 4 : index
    %c0_35 = arith.constant 0 : index
    %c0_36 = arith.constant 0 : index
    %44 = vector.load %arg4[%c4, %c0_35, %c0_36] : memref<10x256x256xf32, #tpu.memory_space<vmem>>, vector<1x256x256xf32>
    %45 = vector.shape_cast %44 : vector<1x256x256xf32> to vector<256x256xf32>
    %cst_37 = arith.constant dense<0.000000e+00> : vector<8x256xf32>
    %46 = tpu.matmul %43, %45, %cst_37 {dimension_numbers = #tpu.dot_dimension_numbers<[1], [0], [0], [1], [0, 0, 1, 1], [], []>} : vector<8x256xf32>, vector<256x256xf32>, vector<8x256xf32> -> vector<8x256xf32>
    %c4_38 = arith.constant 4 : index
    %c0_39 = arith.constant 0 : index
    %c0_40 = arith.constant 0 : index
    %47 = vector.load %arg5[%c4_38, %c0_39, %c0_40] : memref<10x1x256xf32, #tpu.memory_space<vmem>>, vector<1x1x256xf32>
    %48 = vector.shape_cast %47 : vector<1x1x256xf32> to vector<1x256xf32>
    %49 = vector.broadcast %48 : vector<1x256xf32> to vector<8x256xf32>
    %50 = arith.addf %46, %49 : vector<8x256xf32>
    %cst_41 = arith.constant 0.000000e+00 : f32
    %51 = vector.broadcast %cst_41 : f32 to vector<8x256xf32>
    %52 = arith.maximumf %50, %51 : vector<8x256xf32>
    %c5 = arith.constant 5 : index
    %c0_42 = arith.constant 0 : index
    %c0_43 = arith.constant 0 : index
    %53 = vector.load %arg4[%c5, %c0_42, %c0_43] : memref<10x256x256xf32, #tpu.memory_space<vmem>>, vector<1x256x256xf32>
    %54 = vector.shape_cast %53 : vector<1x256x256xf32> to vector<256x256xf32>
    %cst_44 = arith.constant dense<0.000000e+00> : vector<8x256xf32>
    %55 = tpu.matmul %52, %54, %cst_44 {dimension_numbers = #tpu.dot_dimension_numbers<[1], [0], [0], [1], [0, 0, 1, 1], [], []>} : vector<8x256xf32>, vector<256x256xf32>, vector<8x256xf32> -> vector<8x256xf32>
    %c5_45 = arith.constant 5 : index
    %c0_46 = arith.constant 0 : index
    %c0_47 = arith.constant 0 : index
    %56 = vector.load %arg5[%c5_45, %c0_46, %c0_47] : memref<10x1x256xf32, #tpu.memory_space<vmem>>, vector<1x1x256xf32>
    %57 = vector.shape_cast %56 : vector<1x1x256xf32> to vector<1x256xf32>
    %58 = vector.broadcast %57 : vector<1x256xf32> to vector<8x256xf32>
    %59 = arith.addf %55, %58 : vector<8x256xf32>
    %cst_48 = arith.constant 0.000000e+00 : f32
    %60 = vector.broadcast %cst_48 : f32 to vector<8x256xf32>
    %61 = arith.maximumf %59, %60 : vector<8x256xf32>
    %c6 = arith.constant 6 : index
    %c0_49 = arith.constant 0 : index
    %c0_50 = arith.constant 0 : index
    %62 = vector.load %arg4[%c6, %c0_49, %c0_50] : memref<10x256x256xf32, #tpu.memory_space<vmem>>, vector<1x256x256xf32>
    %63 = vector.shape_cast %62 : vector<1x256x256xf32> to vector<256x256xf32>
    %cst_51 = arith.constant dense<0.000000e+00> : vector<8x256xf32>
    %64 = tpu.matmul %61, %63, %cst_51 {dimension_numbers = #tpu.dot_dimension_numbers<[1], [0], [0], [1], [0, 0, 1, 1], [], []>} : vector<8x256xf32>, vector<256x256xf32>, vector<8x256xf32> -> vector<8x256xf32>
    %c6_52 = arith.constant 6 : index
    %c0_53 = arith.constant 0 : index
    %c0_54 = arith.constant 0 : index
    %65 = vector.load %arg5[%c6_52, %c0_53, %c0_54] : memref<10x1x256xf32, #tpu.memory_space<vmem>>, vector<1x1x256xf32>
    %66 = vector.shape_cast %65 : vector<1x1x256xf32> to vector<1x256xf32>
    %67 = vector.broadcast %66 : vector<1x256xf32> to vector<8x256xf32>
    %68 = arith.addf %64, %67 : vector<8x256xf32>
    %cst_55 = arith.constant 0.000000e+00 : f32
    %69 = vector.broadcast %cst_55 : f32 to vector<8x256xf32>
    %70 = arith.maximumf %68, %69 : vector<8x256xf32>
    %c7 = arith.constant 7 : index
    %c0_56 = arith.constant 0 : index
    %c0_57 = arith.constant 0 : index
    %71 = vector.load %arg4[%c7, %c0_56, %c0_57] : memref<10x256x256xf32, #tpu.memory_space<vmem>>, vector<1x256x256xf32>
    %72 = vector.shape_cast %71 : vector<1x256x256xf32> to vector<256x256xf32>
    %cst_58 = arith.constant dense<0.000000e+00> : vector<8x256xf32>
    %73 = tpu.matmul %70, %72, %cst_58 {dimension_numbers = #tpu.dot_dimension_numbers<[1], [0], [0], [1], [0, 0, 1, 1], [], []>} : vector<8x256xf32>, vector<256x256xf32>, vector<8x256xf32> -> vector<8x256xf32>
    %c7_59 = arith.constant 7 : index
    %c0_60 = arith.constant 0 : index
    %c0_61 = arith.constant 0 : index
    %74 = vector.load %arg5[%c7_59, %c0_60, %c0_61] : memref<10x1x256xf32, #tpu.memory_space<vmem>>, vector<1x1x256xf32>
    %75 = vector.shape_cast %74 : vector<1x1x256xf32> to vector<1x256xf32>
    %76 = vector.broadcast %75 : vector<1x256xf32> to vector<8x256xf32>
    %77 = arith.addf %73, %76 : vector<8x256xf32>
    %cst_62 = arith.constant 0.000000e+00 : f32
    %78 = vector.broadcast %cst_62 : f32 to vector<8x256xf32>
    %79 = arith.maximumf %77, %78 : vector<8x256xf32>
    %c8 = arith.constant 8 : index
    %c0_63 = arith.constant 0 : index
    %c0_64 = arith.constant 0 : index
    %80 = vector.load %arg4[%c8, %c0_63, %c0_64] : memref<10x256x256xf32, #tpu.memory_space<vmem>>, vector<1x256x256xf32>
    %81 = vector.shape_cast %80 : vector<1x256x256xf32> to vector<256x256xf32>
    %cst_65 = arith.constant dense<0.000000e+00> : vector<8x256xf32>
    %82 = tpu.matmul %79, %81, %cst_65 {dimension_numbers = #tpu.dot_dimension_numbers<[1], [0], [0], [1], [0, 0, 1, 1], [], []>} : vector<8x256xf32>, vector<256x256xf32>, vector<8x256xf32> -> vector<8x256xf32>
    %c8_66 = arith.constant 8 : index
    %c0_67 = arith.constant 0 : index
    %c0_68 = arith.constant 0 : index
    %83 = vector.load %arg5[%c8_66, %c0_67, %c0_68] : memref<10x1x256xf32, #tpu.memory_space<vmem>>, vector<1x1x256xf32>
    %84 = vector.shape_cast %83 : vector<1x1x256xf32> to vector<1x256xf32>
    %85 = vector.broadcast %84 : vector<1x256xf32> to vector<8x256xf32>
    %86 = arith.addf %82, %85 : vector<8x256xf32>
    %cst_69 = arith.constant 0.000000e+00 : f32
    %87 = vector.broadcast %cst_69 : f32 to vector<8x256xf32>
    %88 = arith.maximumf %86, %87 : vector<8x256xf32>
    %c9 = arith.constant 9 : index
    %c0_70 = arith.constant 0 : index
    %c0_71 = arith.constant 0 : index
    %89 = vector.load %arg4[%c9, %c0_70, %c0_71] : memref<10x256x256xf32, #tpu.memory_space<vmem>>, vector<1x256x256xf32>
    %90 = vector.shape_cast %89 : vector<1x256x256xf32> to vector<256x256xf32>
    %cst_72 = arith.constant dense<0.000000e+00> : vector<8x256xf32>
    %91 = tpu.matmul %88, %90, %cst_72 {dimension_numbers = #tpu.dot_dimension_numbers<[1], [0], [0], [1], [0, 0, 1, 1], [], []>} : vector<8x256xf32>, vector<256x256xf32>, vector<8x256xf32> -> vector<8x256xf32>
    %c9_73 = arith.constant 9 : index
    %c0_74 = arith.constant 0 : index
    %c0_75 = arith.constant 0 : index
    %92 = vector.load %arg5[%c9_73, %c0_74, %c0_75] : memref<10x1x256xf32, #tpu.memory_space<vmem>>, vector<1x1x256xf32>
    %93 = vector.shape_cast %92 : vector<1x1x256xf32> to vector<1x256xf32>
    %94 = vector.broadcast %93 : vector<1x256xf32> to vector<8x256xf32>
    %95 = arith.addf %91, %94 : vector<8x256xf32>
    %cst_76 = arith.constant 0.000000e+00 : f32
    %96 = vector.broadcast %cst_76 : f32 to vector<8x256xf32>
    %97 = arith.maximumf %95, %96 : vector<8x256xf32>
    %c0_77 = arith.constant 0 : index
    %c0_78 = arith.constant 0 : index
    %98 = vector.load %arg6[%c0_77, %c0_78] : memref<256x128xf32, #tpu.memory_space<vmem>>, vector<256x128xf32>
    %cst_79 = arith.constant dense<0.000000e+00> : vector<8x128xf32>
    %99 = tpu.matmul %97, %98, %cst_79 {dimension_numbers = #tpu.dot_dimension_numbers<[1], [0], [0], [1], [0, 0, 1, 1], [], []>} : vector<8x256xf32>, vector<256x128xf32>, vector<8x128xf32> -> vector<8x128xf32>
    %c0_80 = arith.constant 0 : index
    %c0_81 = arith.constant 0 : index
    %100 = vector.load %arg7[%c0_80, %c0_81] : memref<1x128xf32, #tpu.memory_space<vmem>>, vector<1x128xf32>
    %101 = vector.broadcast %100 : vector<1x128xf32> to vector<8x128xf32>
    %102 = arith.addf %99, %101 : vector<8x128xf32>
    %cst_82 = arith.constant 0.000000e+00 : f32
    %103 = vector.broadcast %cst_82 : f32 to vector<8x128xf32>
    %104 = arith.subf %103, %102 : vector<8x128xf32>
    %105 = math.exp %104 : vector<8x128xf32>
    %cst_83 = arith.constant 1.000000e+00 : f32
    %106 = vector.broadcast %cst_83 : f32 to vector<8x128xf32>
    %107 = arith.addf %106, %105 : vector<8x128xf32>
    %108 = tpu.reciprocal %107 {approx = true} : vector<8x128xf32> -> vector<8x128xf32>
    %c0_84 = arith.constant 0 : index
    %c0_85 = arith.constant 0 : index
    %109 = vector.load %arg8[%c0_84, %c0_85] : memref<8x128xf32, #tpu.memory_space<vmem>>, vector<8x128xf32>
    tpu.vector_store %arg8[%c0_84, %c0_85], %108 {strides = array<i32>} : memref<8x128xf32, #tpu.memory_space<vmem>>, vector<8x128xf32>,
    return
  }
  func.func @transform_0(%arg0: i32) -> (i32, i32) {
    %c0_i32 = arith.constant 0 : i32
    %c0_i32_0 = arith.constant 0 : i32
    return %arg0, %c0_i32 : i32, i32
  }
  func.func @transform_1(%arg0: i32) -> (i32, i32) {
    %c0_i32 = arith.constant 0 : i32
    %c0_i32_0 = arith.constant 0 : i32
    %c0_i32_1 = arith.constant 0 : i32
    return %c0_i32, %c0_i32_0 : i32, i32
  }
  func.func @transform_2(%arg0: i32) -> (i32, i32) {
    %c0_i32 = arith.constant 0 : i32
    %c0_i32_0 = arith.constant 0 : i32
    %c0_i32_1 = arith.constant 0 : i32
    return %c0_i32, %c0_i32_0 : i32, i32
  }
  func.func @transform_3(%arg0: i32) -> (i32, i32, i32) {
    %c0_i32 = arith.constant 0 : i32
    %c0_i32_0 = arith.constant 0 : i32
    %c0_i32_1 = arith.constant 0 : i32
    %c0_i32_2 = arith.constant 0 : i32
    return %c0_i32, %c0_i32_0, %c0_i32_1 : i32, i32, i32
  }
  func.func @transform_4(%arg0: i32) -> (i32, i32, i32) {
    %c0_i32 = arith.constant 0 : i32
    %c0_i32_0 = arith.constant 0 : i32
    %c0_i32_1 = arith.constant 0 : i32
    %c0_i32_2 = arith.constant 0 : i32
    return %c0_i32, %c0_i32_0, %c0_i32_1 : i32, i32, i32
  }
  func.func @transform_5(%arg0: i32) -> (i32, i32) {
    %c0_i32 = arith.constant 0 : i32
    %c0_i32_0 = arith.constant 0 : i32
    %c0_i32_1 = arith.constant 0 : i32
    return %c0_i32, %c0_i32_0 : i32, i32
  }
  func.func @transform_6(%arg0: i32) -> (i32, i32) {
    %c0_i32 = arith.constant 0 : i32
    %c0_i32_0 = arith.constant 0 : i32
    %c0_i32_1 = arith.constant 0 : i32
    return %c0_i32, %c0_i32_0 : i32, i32
  }
  func.func @transform_7(%arg0: i32) -> (i32, i32) {
    %c0_i32 = arith.constant 0 : i32
    %c0_i32_0 = arith.constant 0 : i32
    return %arg0, %c0_i32 : i32, i32
  }
}

</mosaic_0001>

<llo_original>
// kernel: mlp_forward.1
$region0: #{mlp_forward.1}
  #allocation0 [shape = 'u32[]', space=smem, size = 0x4, offset = 0x4, fixed_abs, tag = 'smem constant byte address 0x4 - core index']
  #allocation1 [shape = 'u32[144,128]{1,0:T(1,128)}', space=vmem, size = 0x12000, scoped, tag = 'internal scratch']
  %s0 = inlined_call_operand.vmem [shape: f32[8,128], index: 0, kind: input, shape index: {}]
  %s1 = inlined_call_operand.vmem [shape: f32[128,256], index: 1, kind: input, shape index: {}]
  %s2 = inlined_call_operand.vmem [shape: f32[1,256], index: 2, kind: input, shape index: {}]
  %s3 = inlined_call_operand.vmem [shape: f32[10,256,256], index: 3, kind: input, shape index: {}]
  %s4 = inlined_call_operand.vmem [shape: f32[10,1,256], index: 4, kind: input, shape index: {}]
  %s5 = inlined_call_operand.vmem [shape: f32[256,128], index: 5, kind: input, shape index: {}]
  %s6 = inlined_call_operand.vmem [shape: f32[1,128], index: 6, kind: input, shape index: {}]
  %s7 = inlined_call_operand.vmem [shape: f32[8,128], index: 7, kind: output, shape index: {}]
  %s8 = sld [smem:[#allocation0]]
  $region38: #{mlp_forward.1} parent=0
    _
  %s10 = ssub.s32 1, %s8
  %s11 = scalar_select 0, %s10, %s8
  // Predicated region
  $region2: #{mlp_forward.1} parent=0 // pred_check
    _
  $region3: #{mlp_forward.1} parent=0 // pred_check_branch
    %13 = sbr.rel (0) target = $region5
  $region4: #{mlp_forward.1} parent=0 // pred_region
    _
  $region5: #{mlp_forward.1} parent=0 // pred_fallthru
    _
  // Predicated region
  $region6: #{mlp_forward.1} parent=0 // pred_check
    _
  $region7: #{mlp_forward.1} parent=0 // pred_check_branch
    %15 = sbr.rel (0) target = $region9
  $region8: #{mlp_forward.1} parent=0 // pred_region
    _
  $region9: #{mlp_forward.1} parent=0 // pred_fallthru
    _
  // Predicated region
  $region10: #{mlp_forward.1} parent=0 // pred_check
    _
  $region11: #{mlp_forward.1} parent=0 // pred_check_branch
    %17 = sbr.rel (0) target = $region13
  $region12: #{mlp_forward.1} parent=0 // pred_region
    _
  $region13: #{mlp_forward.1} parent=0 // pred_fallthru
    _
  // Predicated region
  $region14: #{mlp_forward.1} parent=0 // pred_check
    _
  $region15: #{mlp_forward.1} parent=0 // pred_check_branch
    %19 = sbr.rel (0) target = $region17
  $region16: #{mlp_forward.1} parent=0 // pred_region
    _
  $region17: #{mlp_forward.1} parent=0 // pred_fallthru
    _
  // Predicated region
  $region18: #{mlp_forward.1} parent=0 // pred_check
    _
  $region19: #{mlp_forward.1} parent=0 // pred_check_branch
    %21 = sbr.rel (0) target = $region21
  $region20: #{mlp_forward.1} parent=0 // pred_region
    _
  $region21: #{mlp_forward.1} parent=0 // pred_fallthru
    _
  // Predicated region
  $region22: #{mlp_forward.1} parent=0 // pred_check
    _
  $region23: #{mlp_forward.1} parent=0 // pred_check_branch
    %23 = sbr.rel (0) target = $region25
  $region24: #{mlp_forward.1} parent=0 // pred_region
    _
  $region25: #{mlp_forward.1} parent=0 // pred_fallthru
    _
  // Predicated region
  $region26: #{mlp_forward.1} parent=0 // pred_check
    _
  $region27: #{mlp_forward.1} parent=0 // pred_check_branch
    %25 = sbr.rel (0) target = $region29
  $region28: #{mlp_forward.1} parent=0 // pred_region
    _
  $region29: #{mlp_forward.1} parent=0 // pred_fallthru
    _
  %v26 = vld [vmem:[%s0] sm:$0xff]
  %v27 = vld [vmem:[%s1] sm:$0xff]
  %v28 = vld [vmem:[%s1 + $0x8] sm:$0xff]
  %v29 = vld [vmem:[%s1 + $0x10] sm:$0xff]
  %v30 = vld [vmem:[%s1 + $0x18] sm:$0xff]
  %v31 = vld [vmem:[%s1 + $0x20] sm:$0xff]
  %v32 = vld [vmem:[%s1 + $0x28] sm:$0xff]
  %v33 = vld [vmem:[%s1 + $0x30] sm:$0xff]
  %v34 = vld [vmem:[%s1 + $0x38] sm:$0xff]
  %v35 = vld [vmem:[%s1 + $0x40] sm:$0xff]
  %v36 = vld [vmem:[%s1 + $0x48] sm:$0xff]
  %v37 = vld [vmem:[%s1 + $0x50] sm:$0xff]
  %v38 = vld [vmem:[%s1 + $0x58] sm:$0xff]
  %v39 = vld [vmem:[%s1 + $0x60] sm:$0xff]
  %v40 = vld [vmem:[%s1 + $0x68] sm:$0xff]
  %v41 = vld [vmem:[%s1 + $0x70] sm:$0xff]
  %v42 = vld [vmem:[%s1 + $0x78] sm:$0xff]
  %v43 = vld [vmem:[%s1 + $0x80] sm:$0xff]
  %v44 = vld [vmem:[%s1 + $0x88] sm:$0xff]
  %v45 = vld [vmem:[%s1 + $0x90] sm:$0xff]
  %v46 = vld [vmem:[%s1 + $0x98] sm:$0xff]
  %v47 = vld [vmem:[%s1 + $0xa0] sm:$0xff]
  %v48 = vld [vmem:[%s1 + $0xa8] sm:$0xff]
  %v49 = vld [vmem:[%s1 + $0xb0] sm:$0xff]
  %v50 = vld [vmem:[%s1 + $0xb8] sm:$0xff]
  %v51 = vld [vmem:[%s1 + $0xc0] sm:$0xff]
  %v52 = vld [vmem:[%s1 + $0xc8] sm:$0xff]
  %v53 = vld [vmem:[%s1 + $0xd0] sm:$0xff]
  %v54 = vld [vmem:[%s1 + $0xd8] sm:$0xff]
  %v55 = vld [vmem:[%s1 + $0xe0] sm:$0xff]
  %v56 = vld [vmem:[%s1 + $0xe8] sm:$0xff]
  %v57 = vld [vmem:[%s1 + $0xf0] sm:$0xff]
  %v58 = vld [vmem:[%s1 + $0xf8] sm:$0xff]
  %v59 = vld [vmem:[%s2] sm:$0x3]
  %v61 = vlaneseq
  %v62 = vshrl.u32 %v61, 7
  %v63 = vsub.s32 0, %v62
  %v64 = vrot.slane %v59, %v63
  %v65 = vlaneseq
  %v66 = vshrl.u32 %v65, 7
  %v67 = vsub.s32 1, %v66
  %v68 = vrot.slane %v59, %v67
  %71 = vmatprep.subr.mxu0 %v58
  %72 = vmatpush1.msra.mxu0 %v57
  %73 = vmatprep.subr.mxu0 %v56
  %74 = vmatpush1.msra.mxu0 %v55
  %75 = vmatprep.subr.mxu0 %v54
  %76 = vmatpush1.msra.mxu0 %v53
  %77 = vmatprep.subr.mxu0 %v52
  %78 = vmatpush1.msra.mxu0 %v51
  %79 = vmatprep.subr.mxu0 %v50
  %80 = vmatpush1.msra.mxu0 %v49
  %81 = vmatprep.subr.mxu0 %v48
  %82 = vmatpush1.msra.mxu0 %v47
  %83 = vmatprep.subr.mxu0 %v46
  %84 = vmatpush1.msra.mxu0 %v45
  %85 = vmatprep.subr.mxu0 %v44
  %86 = vmatpush1.msra.mxu0 %v43
  %87 = vmatprep.subr.mxu0 %v42
  %88 = vmatpush1.msra.mxu0 %v41
  %89 = vmatprep.subr.mxu0 %v40
  %90 = vmatpush1.msra.mxu0 %v39
  %91 = vmatprep.subr.mxu0 %v38
  %92 = vmatpush1.msra.mxu0 %v37
  %93 = vmatprep.subr.mxu0 %v36
  %94 = vmatpush1.msra.mxu0 %v35
  %95 = vmatprep.subr.mxu0 %v34
  %96 = vmatpush1.msra.mxu0 %v33
  %97 = vmatprep.subr.mxu0 %v32
  %98 = vmatpush1.msra.mxu0 %v31
  %99 = vmatprep.subr.mxu0 %v30
  %100 = vmatpush1.msra.mxu0 %v29
  %101 = vmatprep.subr.mxu0 %v28
  %102 = vmatpush1.msra.mxu0 %v27
  %103 = vmatprep.subr.mxu0 0.0
  %104 = vmatpush2.msra.mxu0 0.0
  %105 = vmatprep.subr.mxu0 0.0
  %106 = vmatpush2.msra.mxu0 0.0
  %107 = vmatprep.subr.mxu0 0.0
  %108 = vmatpush2.msra.mxu0 0.0
  %109 = vmatprep.subr.mxu0 0.0
  %110 = vmatpush2.msra.mxu0 0.0
  %111 = vmatprep.subr.mxu0 0.0
  %112 = vmatpush2.msra.mxu0 0.0
  %113 = vmatprep.subr.mxu0 0.0
  %114 = vmatpush2.msra.mxu0 0.0
  %115 = vmatprep.subr.mxu0 0.0
  %116 = vmatpush2.msra.mxu0 0.0
  %117 = vmatprep.subr.mxu0 0.0
  %118 = vmatpush2.msra.mxu0 0.0
  %119 = vmatprep.subr.mxu0 0.0
  %120 = vmatpush2.msra.mxu0 0.0
  %121 = vmatprep.subr.mxu0 0.0
  %122 = vmatpush2.msra.mxu0 0.0
  %123 = vmatprep.subr.mxu0 0.0
  %124 = vmatpush2.msra.mxu0 0.0
  %125 = vmatprep.subr.mxu0 0.0
  %126 = vmatpush2.msra.mxu0 0.0
  %127 = vmatprep.subr.mxu0 0.0
  %128 = vmatpush2.msra.mxu0 0.0
  %129 = vmatprep.subr.mxu0 0.0
  %130 = vmatpush2.msra.mxu0 0.0
  %131 = vmatprep.subr.mxu0 0.0
  %132 = vmatpush2.msra.mxu0 0.0
  %133 = vmatprep.subr.mxu0 0.0
  %134 = vmatpush2.msra.mxu0 0.0
  %135 = vmatprep.mubr.f32.mxu0 0.0
  %136 = vmatmul.mubr.f32.gmra.mxu0 %v26
  %v137 = vpop.f32.mrf.mxu0
  %v138 = vadd.f32 %v64, %v137
  %v139 = vpop.f32.mrf.mxu0
  %v140 = vadd.f32 %v68, %v139
  %141 = vdwg.mxu0
  %v142 = vmax.f32 %v138, 0.0
  %v143 = vmax.f32 %v140, 0.0
  %v144 = vld [vmem:[%s3] sm:$0xff]
  %v145 = vld [vmem:[%s3 + $0x8] sm:$0xff]
  %v146 = vld [vmem:[%s3 + $0x10] sm:$0xff]
  %v147 = vld [vmem:[%s3 + $0x18] sm:$0xff]
  %v148 = vld [vmem:[%s3 + $0x20] sm:$0xff]
  %v149 = vld [vmem:[%s3 + $0x28] sm:$0xff]
  %v150 = vld [vmem:[%s3 + $0x30] sm:$0xff]
  %v151 = vld [vmem:[%s3 + $0x38] sm:$0xff]
  %v152 = vld [vmem:[%s3 + $0x40] sm:$0xff]
  %v153 = vld [vmem:[%s3 + $0x48] sm:$0xff]
  %v154 = vld [vmem:[%s3 + $0x50] sm:$0xff]
  %v155 = vld [vmem:[%s3 + $0x58] sm:$0xff]
  %v156 = vld [vmem:[%s3 + $0x60] sm:$0xff]
  %v157 = vld [vmem:[%s3 + $0x68] sm:$0xff]
  %v158 = vld [vmem:[%s3 + $0x70] sm:$0xff]
  %v159 = vld [vmem:[%s3 + $0x78] sm:$0xff]
  %v160 = vld [vmem:[%s3 + $0x80] sm:$0xff]
  %v161 = vld [vmem:[%s3 + $0x88] sm:$0xff]
  %v162 = vld [vmem:[%s3 + $0x90] sm:$0xff]
  %v163 = vld [vmem:[%s3 + $0x98] sm:$0xff]
  %v164 = vld [vmem:[%s3 + $0xa0] sm:$0xff]
  %v165 = vld [vmem:[%s3 + $0xa8] sm:$0xff]
  %v166 = vld [vmem:[%s3 + $0xb0] sm:$0xff]
  %v167 = vld [vmem:[%s3 + $0xb8] sm:$0xff]
  %v168 = vld [vmem:[%s3 + $0xc0] sm:$0xff]
  %v169 = vld [vmem:[%s3 + $0xc8] sm:$0xff]
  %v170 = vld [vmem:[%s3 + $0xd0] sm:$0xff]
  %v171 = vld [vmem:[%s3 + $0xd8] sm:$0xff]
  %v172 = vld [vmem:[%s3 + $0xe0] sm:$0xff]
  %v173 = vld [vmem:[%s3 + $0xe8] sm:$0xff]
  %v174 = vld [vmem:[%s3 + $0xf0] sm:$0xff]
  %v175 = vld [vmem:[%s3 + $0xf8] sm:$0xff]
  %v176 = vld [vmem:[%s3 + $0x100] sm:$0xff]
  %v177 = vld [vmem:[%s3 + $0x108] sm:$0xff]
  %v178 = vld [vmem:[%s3 + $0x110] sm:$0xff]
  %v179 = vld [vmem:[%s3 + $0x118] sm:$0xff]
  %v180 = vld [vmem:[%s3 + $0x120] sm:$0xff]
  %v181 = vld [vmem:[%s3 + $0x128] sm:$0xff]
  %v182 = vld [vmem:[%s3 + $0x130] sm:$0xff]
  %v183 = vld [vmem:[%s3 + $0x138] sm:$0xff]
  %v184 = vld [vmem:[%s3 + $0x140] sm:$0xff]
  %v185 = vld [vmem:[%s3 + $0x148] sm:$0xff]
  %v186 = vld [vmem:[%s3 + $0x150] sm:$0xff]
  %v187 = vld [vmem:[%s3 + $0x158] sm:$0xff]
  %v188 = vld [vmem:[%s3 + $0x160] sm:$0xff]
  %v189 = vld [vmem:[%s3 + $0x168] sm:$0xff]
  %v190 = vld [vmem:[%s3 + $0x170] sm:$0xff]
  %v191 = vld [vmem:[%s3 + $0x178] sm:$0xff]
  %v192 = vld [vmem:[%s3 + $0x180] sm:$0xff]
  %v193 = vld [vmem:[%s3 + $0x188] sm:$0xff]
  %v194 = vld [vmem:[%s3 + $0x190] sm:$0xff]
  %v195 = vld [vmem:[%s3 + $0x198] sm:$0xff]
  %v196 = vld [vmem:[%s3 + $0x1a0] sm:$0xff]
  %v197 = vld [vmem:[%s3 + $0x1a8] sm:$0xff]
  %v198 = vld [vmem:[%s3 + $0x1b0] sm:$0xff]
  %v199 = vld [vmem:[%s3 + $0x1b8] sm:$0xff]
  %v200 = vld [vmem:[%s3 + $0x1c0] sm:$0xff]
  %v201 = vld [vmem:[%s3 + $0x1c8] sm:$0xff]
  %v202 = vld [vmem:[%s3 + $0x1d0] sm:$0xff]
  %v203 = vld [vmem:[%s3 + $0x1d8] sm:$0xff]
  %v204 = vld [vmem:[%s3 + $0x1e0] sm:$0xff]
  %v205 = vld [vmem:[%s3 + $0x1e8] sm:$0xff]
  %v206 = vld [vmem:[%s3 + $0x1f0] sm:$0xff]
  %v207 = vld [vmem:[%s3 + $0x1f8] sm:$0xff]
  %v208 = vld [vmem:[%s4] sm:$0x3]
  %v210 = vlaneseq
  %v211 = vshrl.u32 %v210, 7
  %v212 = vsub.s32 0, %v211
  %v213 = vrot.slane %v208, %v212
  %v214 = vlaneseq
  %v215 = vshrl.u32 %v214, 7
  %v216 = vsub.s32 1, %v215
  %v217 = vrot.slane %v208, %v216
  %220 = vmatprep.subr.mxu0 %v175
  %221 = vmatpush1.msra.mxu0 %v174
  %222 = vmatprep.subr.mxu0 %v173
  %223 = vmatpush1.msra.mxu0 %v172
  %224 = vmatprep.subr.mxu0 %v171
  %225 = vmatpush1.msra.mxu0 %v170
  %226 = vmatprep.subr.mxu0 %v169
  %227 = vmatpush1.msra.mxu0 %v168
  %228 = vmatprep.subr.mxu0 %v167
  %229 = vmatpush1.msra.mxu0 %v166
  %230 = vmatprep.subr.mxu0 %v165
  %231 = vmatpush1.msra.mxu0 %v164
  %232 = vmatprep.subr.mxu0 %v163
  %233 = vmatpush1.msra.mxu0 %v162
  %234 = vmatprep.subr.mxu0 %v161
  %235 = vmatpush1.msra.mxu0 %v160
  %236 = vmatprep.subr.mxu0 %v159
  %237 = vmatpush1.msra.mxu0 %v158
  %238 = vmatprep.subr.mxu0 %v157
  %239 = vmatpush1.msra.mxu0 %v156
  %240 = vmatprep.subr.mxu0 %v155
  %241 = vmatpush1.msra.mxu0 %v154
  %242 = vmatprep.subr.mxu0 %v153
  %243 = vmatpush1.msra.mxu0 %v152
  %244 = vmatprep.subr.mxu0 %v151
  %245 = vmatpush1.msra.mxu0 %v150
  %246 = vmatprep.subr.mxu0 %v149
  %247 = vmatpush1.msra.mxu0 %v148
  %248 = vmatprep.subr.mxu0 %v147
  %249 = vmatpush1.msra.mxu0 %v146
  %250 = vmatprep.subr.mxu0 %v145
  %251 = vmatpush1.msra.mxu0 %v144
  %252 = vmatprep.subr.mxu0 %v207
  %253 = vmatpush2.msra.mxu0 %v206
  %254 = vmatprep.subr.mxu0 %v205
  %255 = vmatpush2.msra.mxu0 %v204
  %256 = vmatprep.subr.mxu0 %v203
  %257 = vmatpush2.msra.mxu0 %v202
  %258 = vmatprep.subr.mxu0 %v201
  %259 = vmatpush2.msra.mxu0 %v200
  %260 = vmatprep.subr.mxu0 %v199
  %261 = vmatpush2.msra.mxu0 %v198
  %262 = vmatprep.subr.mxu0 %v197
  %263 = vmatpush2.msra.mxu0 %v196
  %264 = vmatprep.subr.mxu0 %v195
  %265 = vmatpush2.msra.mxu0 %v194
  %266 = vmatprep.subr.mxu0 %v193
  %267 = vmatpush2.msra.mxu0 %v192
  %268 = vmatprep.subr.mxu0 %v191
  %269 = vmatpush2.msra.mxu0 %v190
  %270 = vmatprep.subr.mxu0 %v189
  %271 = vmatpush2.msra.mxu0 %v188
  %272 = vmatprep.subr.mxu0 %v187
  %273 = vmatpush2.msra.mxu0 %v186
  %274 = vmatprep.subr.mxu0 %v185
  %275 = vmatpush2.msra.mxu0 %v184
  %276 = vmatprep.subr.mxu0 %v183
  %277 = vmatpush2.msra.mxu0 %v182
  %278 = vmatprep.subr.mxu0 %v181
  %279 = vmatpush2.msra.mxu0 %v180
  %280 = vmatprep.subr.mxu0 %v179
  %281 = vmatpush2.msra.mxu0 %v178
  %282 = vmatprep.subr.mxu0 %v177
  %283 = vmatpush2.msra.mxu0 %v176
  %284 = vmatprep.mubr.f32.mxu0 %v143
  %285 = vmatmul.mubr.f32.gmra.mxu0 %v142
  %v286 = vpop.f32.mrf.mxu0
  %v287 = vadd.f32 %v213, %v286
  %v288 = vpop.f32.mrf.mxu0
  %v289 = vadd.f32 %v217, %v288
  %290 = vdwg.mxu0
  %v291 = vmax.f32 %v287, 0.0
  %v292 = vmax.f32 %v289, 0.0
  %s293 = scalar_lea.vmem %s3, 512
  %v294 = vld [vmem:[%s293] sm:$0xff]
  %v295 = vld [vmem:[%s293 + $0x8] sm:$0xff]
  %v296 = vld [vmem:[%s293 + $0x10] sm:$0xff]
  %v297 = vld [vmem:[%s293 + $0x18] sm:$0xff]
  %v298 = vld [vmem:[%s293 + $0x20] sm:$0xff]
  %v299 = vld [vmem:[%s293 + $0x28] sm:$0xff]
  %v300 = vld [vmem:[%s293 + $0x30] sm:$0xff]
  %v301 = vld [vmem:[%s293 + $0x38] sm:$0xff]
  %v302 = vld [vmem:[%s293 + $0x40] sm:$0xff]
  %v303 = vld [vmem:[%s293 + $0x48] sm:$0xff]
  %v304 = vld [vmem:[%s293 + $0x50] sm:$0xff]
  %v305 = vld [vmem:[%s293 + $0x58] sm:$0xff]
  %v306 = vld [vmem:[%s293 + $0x60] sm:$0xff]
  %v307 = vld [vmem:[%s293 + $0x68] sm:$0xff]
  %v308 = vld [vmem:[%s293 + $0x70] sm:$0xff]
  %v309 = vld [vmem:[%s293 + $0x78] sm:$0xff]
  %v310 = vld [vmem:[%s293 + $0x80] sm:$0xff]
  %v311 = vld [vmem:[%s293 + $0x88] sm:$0xff]
  %v312 = vld [vmem:[%s293 + $0x90] sm:$0xff]
  %v313 = vld [vmem:[%s293 + $0x98] sm:$0xff]
  %v314 = vld [vmem:[%s293 + $0xa0] sm:$0xff]
  %v315 = vld [vmem:[%s293 + $0xa8] sm:$0xff]
  %v316 = vld [vmem:[%s293 + $0xb0] sm:$0xff]
  %v317 = vld [vmem:[%s293 + $0xb8] sm:$0xff]
  %v318 = vld [vmem:[%s293 + $0xc0] sm:$0xff]
  %v319 = vld [vmem:[%s293 + $0xc8] sm:$0xff]
  %v320 = vld [vmem:[%s293 + $0xd0] sm:$0xff]
  %v321 = vld [vmem:[%s293 + $0xd8] sm:$0xff]
  %v322 = vld [vmem:[%s293 + $0xe0] sm:$0xff]
  %v323 = vld [vmem:[%s293 + $0xe8] sm:$0xff]
  %v324 = vld [vmem:[%s293 + $0xf0] sm:$0xff]
  %v325 = vld [vmem:[%s293 + $0xf8] sm:$0xff]
  %v326 = vld [vmem:[%s293 + $0x100] sm:$0xff]
  %v327 = vld [vmem:[%s293 + $0x108] sm:$0xff]
  %v328 = vld [vmem:[%s293 + $0x110] sm:$0xff]
  %v329 = vld [vmem:[%s293 + $0x118] sm:$0xff]
  %v330 = vld [vmem:[%s293 + $0x120] sm:$0xff]
  %v331 = vld [vmem:[%s293 + $0x128] sm:$0xff]
  %v332 = vld [vmem:[%s293 + $0x130] sm:$0xff]
  %v333 = vld [vmem:[%s293 + $0x138] sm:$0xff]
  %v334 = vld [vmem:[%s293 + $0x140] sm:$0xff]
  %v335 = vld [vmem:[%s293 + $0x148] sm:$0xff]
  %v336 = vld [vmem:[%s293 + $0x150] sm:$0xff]
  %v337 = vld [vmem:[%s293 + $0x158] sm:$0xff]
  %v338 = vld [vmem:[%s293 + $0x160] sm:$0xff]
  %v339 = vld [vmem:[%s293 + $0x168] sm:$0xff]
  %v340 = vld [vmem:[%s293 + $0x170] sm:$0xff]
  %v341 = vld [vmem:[%s293 + $0x178] sm:$0xff]
  %v342 = vld [vmem:[%s293 + $0x180] sm:$0xff]
  %v343 = vld [vmem:[%s293 + $0x188] sm:$0xff]
  %v344 = vld [vmem:[%s293 + $0x190] sm:$0xff]
  %v345 = vld [vmem:[%s293 + $0x198] sm:$0xff]
  %v346 = vld [vmem:[%s293 + $0x1a0] sm:$0xff]
  %v347 = vld [vmem:[%s293 + $0x1a8] sm:$0xff]
  %v348 = vld [vmem:[%s293 + $0x1b0] sm:$0xff]
  %v349 = vld [vmem:[%s293 + $0x1b8] sm:$0xff]
  %v350 = vld [vmem:[%s293 + $0x1c0] sm:$0xff]
  %v351 = vld [vmem:[%s293 + $0x1c8] sm:$0xff]
  %v352 = vld [vmem:[%s293 + $0x1d0] sm:$0xff]
  %v353 = vld [vmem:[%s293 + $0x1d8] sm:$0xff]
  %v354 = vld [vmem:[%s293 + $0x1e0] sm:$0xff]
  %v355 = vld [vmem:[%s293 + $0x1e8] sm:$0xff]
  %v356 = vld [vmem:[%s293 + $0x1f0] sm:$0xff]
  %v357 = vld [vmem:[%s293 + $0x1f8] sm:$0xff]
  %s358 = scalar_lea.vmem %s4, 2
  %v359 = vld [vmem:[%s358] sm:$0x3]
  %v361 = vlaneseq
  %v362 = vshrl.u32 %v361, 7
  %v363 = vsub.s32 0, %v362
  %v364 = vrot.slane %v359, %v363
  %v365 = vlaneseq
  %v366 = vshrl.u32 %v365, 7
  %v367 = vsub.s32 1, %v366
  %v368 = vrot.slane %v359, %v367
  %371 = vmatprep.subr.mxu0 %v325
  %372 = vmatpush1.msra.mxu0 %v324
  %373 = vmatprep.subr.mxu0 %v323
  %374 = vmatpush1.msra.mxu0 %v322
  %375 = vmatprep.subr.mxu0 %v321
  %376 = vmatpush1.msra.mxu0 %v320
  %377 = vmatprep.subr.mxu0 %v319
  %378 = vmatpush1.msra.mxu0 %v318
  %379 = vmatprep.subr.mxu0 %v317
  %380 = vmatpush1.msra.mxu0 %v316
  %381 = vmatprep.subr.mxu0 %v315
  %382 = vmatpush1.msra.mxu0 %v314
  %383 = vmatprep.subr.mxu0 %v313
  %384 = vmatpush1.msra.mxu0 %v312
  %385 = vmatprep.subr.mxu0 %v311
  %386 = vmatpush1.msra.mxu0 %v310
  %387 = vmatprep.subr.mxu0 %v309
  %388 = vmatpush1.msra.mxu0 %v308
  %389 = vmatprep.subr.mxu0 %v307
  %390 = vmatpush1.msra.mxu0 %v306
  %391 = vmatprep.subr.mxu0 %v305
  %392 = vmatpush1.msra.mxu0 %v304
  %393 = vmatprep.subr.mxu0 %v303
  %394 = vmatpush1.msra.mxu0 %v302
  %395 = vmatprep.subr.mxu0 %v301
  %396 = vmatpush1.msra.mxu0 %v300
  %397 = vmatprep.subr.mxu0 %v299
  %398 = vmatpush1.msra.mxu0 %v298
  %399 = vmatprep.subr.mxu0 %v297
  %400 = vmatpush1.msra.mxu0 %v296
  %401 = vmatprep.subr.mxu0 %v295
  %402 = vmatpush1.msra.mxu0 %v294
  %403 = vmatprep.subr.mxu0 %v357
  %404 = vmatpush2.msra.mxu0 %v356
  %405 = vmatprep.subr.mxu0 %v355
  %406 = vmatpush2.msra.mxu0 %v354
  %407 = vmatprep.subr.mxu0 %v353
  %408 = vmatpush2.msra.mxu0 %v352
  %409 = vmatprep.subr.mxu0 %v351
  %410 = vmatpush2.msra.mxu0 %v350
  %411 = vmatprep.subr.mxu0 %v349
  %412 = vmatpush2.msra.mxu0 %v348
  %413 = vmatprep.subr.mxu0 %v347
  %414 = vmatpush2.msra.mxu0 %v346
  %415 = vmatprep.subr.mxu0 %v345
  %416 = vmatpush2.msra.mxu0 %v344
  %417 = vmatprep.subr.mxu0 %v343
  %418 = vmatpush2.msra.mxu0 %v342
  %419 = vmatprep.subr.mxu0 %v341
  %420 = vmatpush2.msra.mxu0 %v340
  %421 = vmatprep.subr.mxu0 %v339
  %422 = vmatpush2.msra.mxu0 %v338
  %423 = vmatprep.subr.mxu0 %v337
  %424 = vmatpush2.msra.mxu0 %v336
  %425 = vmatprep.subr.mxu0 %v335
  %426 = vmatpush2.msra.mxu0 %v334
  %427 = vmatprep.subr.mxu0 %v333
  %428 = vmatpush2.msra.mxu0 %v332
  %429 = vmatprep.subr.mxu0 %v331
  %430 = vmatpush2.msra.mxu0 %v330
  %431 = vmatprep.subr.mxu0 %v329
  %432 = vmatpush2.msra.mxu0 %v328
  %433 = vmatprep.subr.mxu0 %v327
  %434 = vmatpush2.msra.mxu0 %v326
  %435 = vmatprep.mubr.f32.mxu0 %v292
  %436 = vmatmul.mubr.f32.gmra.mxu0 %v291
  %v437 = vpop.f32.mrf.mxu0
  %v438 = vadd.f32 %v364, %v437
  %v439 = vpop.f32.mrf.mxu0
  %v440 = vadd.f32 %v368, %v439
  %441 = vdwg.mxu0
  %v442 = vmax.f32 %v438, 0.0
  %v443 = vmax.f32 %v440, 0.0
  %s444 = scalar_lea.vmem %s3, 1024
  %v445 = vld [vmem:[%s444] sm:$0xff]
  %v446 = vld [vmem:[%s444 + $0x8] sm:$0xff]
  %v447 = vld [vmem:[%s444 + $0x10] sm:$0xff]
  %v448 = vld [vmem:[%s444 + $0x18] sm:$0xff]
  %v449 = vld [vmem:[%s444 + $0x20] sm:$0xff]
  %v450 = vld [vmem:[%s444 + $0x28] sm:$0xff]
  %v451 = vld [vmem:[%s444 + $0x30] sm:$0xff]
  %v452 = vld [vmem:[%s444 + $0x38] sm:$0xff]
  %v453 = vld [vmem:[%s444 + $0x40] sm:$0xff]
  %v454 = vld [vmem:[%s444 + $0x48] sm:$0xff]
  %v455 = vld [vmem:[%s444 + $0x50] sm:$0xff]
  %v456 = vld [vmem:[%s444 + $0x58] sm:$0xff]
  %v457 = vld [vmem:[%s444 + $0x60] sm:$0xff]
  %v458 = vld [vmem:[%s444 + $0x68] sm:$0xff]
  %v459 = vld [vmem:[%s444 + $0x70] sm:$0xff]
  %v460 = vld [vmem:[%s444 + $0x78] sm:$0xff]
  %v461 = vld [vmem:[%s444 + $0x80] sm:$0xff]
  %v462 = vld [vmem:[%s444 + $0x88] sm:$0xff]
  %v463 = vld [vmem:[%s444 + $0x90] sm:$0xff]
  %v464 = vld [vmem:[%s444 + $0x98] sm:$0xff]
  %v465 = vld [vmem:[%s444 + $0xa0] sm:$0xff]
  %v466 = vld [vmem:[%s444 + $0xa8] sm:$0xff]
  %v467 = vld [vmem:[%s444 + $0xb0] sm:$0xff]
  %v468 = vld [vmem:[%s444 + $0xb8] sm:$0xff]
  %v469 = vld [vmem:[%s444 + $0xc0] sm:$0xff]
  %v470 = vld [vmem:[%s444 + $0xc8] sm:$0xff]
  %v471 = vld [vmem:[%s444 + $0xd0] sm:$0xff]
  %v472 = vld [vmem:[%s444 + $0xd8] sm:$0xff]
  %v473 = vld [vmem:[%s444 + $0xe0] sm:$0xff]
  %v474 = vld [vmem:[%s444 + $0xe8] sm:$0xff]
  %v475 = vld [vmem:[%s444 + $0xf0] sm:$0xff]
  %v476 = vld [vmem:[%s444 + $0xf8] sm:$0xff]
  %v477 = vld [vmem:[%s444 + $0x100] sm:$0xff]
  %v478 = vld [vmem:[%s444 + $0x108] sm:$0xff]
  %v479 = vld [vmem:[%s444 + $0x110] sm:$0xff]
  %v480 = vld [vmem:[%s444 + $0x118] sm:$0xff]
  %v481 = vld [vmem:[%s444 + $0x120] sm:$0xff]
  %v482 = vld [vmem:[%s444 + $0x128] sm:$0xff]
  %v483 = vld [vmem:[%s444 + $0x130] sm:$0xff]
  %v484 = vld [vmem:[%s444 + $0x138] sm:$0xff]
  %v485 = vld [vmem:[%s444 + $0x140] sm:$0xff]
  %v486 = vld [vmem:[%s444 + $0x148] sm:$0xff]
  %v487 = vld [vmem:[%s444 + $0x150] sm:$0xff]
  %v488 = vld [vmem:[%s444 + $0x158] sm:$0xff]
  %v489 = vld [vmem:[%s444 + $0x160] sm:$0xff]
  %v490 = vld [vmem:[%s444 + $0x168] sm:$0xff]
  %v491 = vld [vmem:[%s444 + $0x170] sm:$0xff]
  %v492 = vld [vmem:[%s444 + $0x178] sm:$0xff]
  %v493 = vld [vmem:[%s444 + $0x180] sm:$0xff]
  %v494 = vld [vmem:[%s444 + $0x188] sm:$0xff]
  %v495 = vld [vmem:[%s444 + $0x190] sm:$0xff]
  %v496 = vld [vmem:[%s444 + $0x198] sm:$0xff]
  %v497 = vld [vmem:[%s444 + $0x1a0] sm:$0xff]
  %v498 = vld [vmem:[%s444 + $0x1a8] sm:$0xff]
  %v499 = vld [vmem:[%s444 + $0x1b0] sm:$0xff]
  %v500 = vld [vmem:[%s444 + $0x1b8] sm:$0xff]
  %v501 = vld [vmem:[%s444 + $0x1c0] sm:$0xff]
  %v502 = vld [vmem:[%s444 + $0x1c8] sm:$0xff]
  %v503 = vld [vmem:[%s444 + $0x1d0] sm:$0xff]
  %v504 = vld [vmem:[%s444 + $0x1d8] sm:$0xff]
  %v505 = vld [vmem:[%s444 + $0x1e0] sm:$0xff]
  %v506 = vld [vmem:[%s444 + $0x1e8] sm:$0xff]
  %v507 = vld [vmem:[%s444 + $0x1f0] sm:$0xff]
  %v508 = vld [vmem:[%s444 + $0x1f8] sm:$0xff]
  %s509 = scalar_lea.vmem %s4, 4
  %v510 = vld [vmem:[%s509] sm:$0x3]
  %v512 = vlaneseq
  %v513 = vshrl.u32 %v512, 7
  %v514 = vsub.s32 0, %v513
  %v515 = vrot.slane %v510, %v514
  %v516 = vlaneseq
  %v517 = vshrl.u32 %v516, 7
  %v518 = vsub.s32 1, %v517
  %v519 = vrot.slane %v510, %v518
  %522 = vmatprep.subr.mxu0 %v476
  %523 = vmatpush1.msra.mxu0 %v475
  %524 = vmatprep.subr.mxu0 %v474
  %525 = vmatpush1.msra.mxu0 %v473
  %526 = vmatprep.subr.mxu0 %v472
  %527 = vmatpush1.msra.mxu0 %v471
  %528 = vmatprep.subr.mxu0 %v470
  %529 = vmatpush1.msra.mxu0 %v469
  %530 = vmatprep.subr.mxu0 %v468
  %531 = vmatpush1.msra.mxu0 %v467
  %532 = vmatprep.subr.mxu0 %v466
  %533 = vmatpush1.msra.mxu0 %v465
  %534 = vmatprep.subr.mxu0 %v464
  %535 = vmatpush1.msra.mxu0 %v463
  %536 = vmatprep.subr.mxu0 %v462
  %537 = vmatpush1.msra.mxu0 %v461
  %538 = vmatprep.subr.mxu0 %v460
  %539 = vmatpush1.msra.mxu0 %v459
  %540 = vmatprep.subr.mxu0 %v458
  %541 = vmatpush1.msra.mxu0 %v457
  %542 = vmatprep.subr.mxu0 %v456
  %543 = vmatpush1.msra.mxu0 %v455
  %544 = vmatprep.subr.mxu0 %v454
  %545 = vmatpush1.msra.mxu0 %v453
  %546 = vmatprep.subr.mxu0 %v452
  %547 = vmatpush1.msra.mxu0 %v451
  %548 = vmatprep.subr.mxu0 %v450
  %549 = vmatpush1.msra.mxu0 %v449
  %550 = vmatprep.subr.mxu0 %v448
  %551 = vmatpush1.msra.mxu0 %v447
  %552 = vmatprep.subr.mxu0 %v446
  %553 = vmatpush1.msra.mxu0 %v445
  %554 = vmatprep.subr.mxu0 %v508
  %555 = vmatpush2.msra.mxu0 %v507
  %556 = vmatprep.subr.mxu0 %v506
  %557 = vmatpush2.msra.mxu0 %v505
  %558 = vmatprep.subr.mxu0 %v504
  %559 = vmatpush2.msra.mxu0 %v503
  %560 = vmatprep.subr.mxu0 %v502
  %561 = vmatpush2.msra.mxu0 %v501
  %562 = vmatprep.subr.mxu0 %v500
  %563 = vmatpush2.msra.mxu0 %v499
  %564 = vmatprep.subr.mxu0 %v498
  %565 = vmatpush2.msra.mxu0 %v497
  %566 = vmatprep.subr.mxu0 %v496
  %567 = vmatpush2.msra.mxu0 %v495
  %568 = vmatprep.subr.mxu0 %v494
  %569 = vmatpush2.msra.mxu0 %v493
  %570 = vmatprep.subr.mxu0 %v492
  %571 = vmatpush2.msra.mxu0 %v491
  %572 = vmatprep.subr.mxu0 %v490
  %573 = vmatpush2.msra.mxu0 %v489
  %574 = vmatprep.subr.mxu0 %v488
  %575 = vmatpush2.msra.mxu0 %v487
  %576 = vmatprep.subr.mxu0 %v486
  %577 = vmatpush2.msra.mxu0 %v485
  %578 = vmatprep.subr.mxu0 %v484
  %579 = vmatpush2.msra.mxu0 %v483
  %580 = vmatprep.subr.mxu0 %v482
  %581 = vmatpush2.msra.mxu0 %v481
  %582 = vmatprep.subr.mxu0 %v480
  %583 = vmatpush2.msra.mxu0 %v479
  %584 = vmatprep.subr.mxu0 %v478
  %585 = vmatpush2.msra.mxu0 %v477
  %586 = vmatprep.mubr.f32.mxu0 %v443
  %587 = vmatmul.mubr.f32.gmra.mxu0 %v442
  %v588 = vpop.f32.mrf.mxu0
  %v589 = vadd.f32 %v515, %v588
  %v590 = vpop.f32.mrf.mxu0
  %v591 = vadd.f32 %v519, %v590
  %592 = vdwg.mxu0
  %v593 = vmax.f32 %v589, 0.0
  %v594 = vmax.f32 %v591, 0.0
  %s595 = scalar_lea.vmem %s3, 1536
  %v596 = vld [vmem:[%s595] sm:$0xff]
  %v597 = vld [vmem:[%s595 + $0x8] sm:$0xff]
  %v598 = vld [vmem:[%s595 + $0x10] sm:$0xff]
  %v599 = vld [vmem:[%s595 + $0x18] sm:$0xff]
  %v600 = vld [vmem:[%s595 + $0x20] sm:$0xff]
  %v601 = vld [vmem:[%s595 + $0x28] sm:$0xff]
  %v602 = vld [vmem:[%s595 + $0x30] sm:$0xff]
  %v603 = vld [vmem:[%s595 + $0x38] sm:$0xff]
  %v604 = vld [vmem:[%s595 + $0x40] sm:$0xff]
  %v605 = vld [vmem:[%s595 + $0x48] sm:$0xff]
  %v606 = vld [vmem:[%s595 + $0x50] sm:$0xff]
  %v607 = vld [vmem:[%s595 + $0x58] sm:$0xff]
  %v608 = vld [vmem:[%s595 + $0x60] sm:$0xff]
  %v609 = vld [vmem:[%s595 + $0x68] sm:$0xff]
  %v610 = vld [vmem:[%s595 + $0x70] sm:$0xff]
  %v611 = vld [vmem:[%s595 + $0x78] sm:$0xff]
  %v612 = vld [vmem:[%s595 + $0x80] sm:$0xff]
  %v613 = vld [vmem:[%s595 + $0x88] sm:$0xff]
  %v614 = vld [vmem:[%s595 + $0x90] sm:$0xff]
  %v615 = vld [vmem:[%s595 + $0x98] sm:$0xff]
  %v616 = vld [vmem:[%s595 + $0xa0] sm:$0xff]
  %v617 = vld [vmem:[%s595 + $0xa8] sm:$0xff]
  %v618 = vld [vmem:[%s595 + $0xb0] sm:$0xff]
  %v619 = vld [vmem:[%s595 + $0xb8] sm:$0xff]
  %v620 = vld [vmem:[%s595 + $0xc0] sm:$0xff]
  %v621 = vld [vmem:[%s595 + $0xc8] sm:$0xff]
  %v622 = vld [vmem:[%s595 + $0xd0] sm:$0xff]
  %v623 = vld [vmem:[%s595 + $0xd8] sm:$0xff]
  %v624 = vld [vmem:[%s595 + $0xe0] sm:$0xff]
  %v625 = vld [vmem:[%s595 + $0xe8] sm:$0xff]
  %v626 = vld [vmem:[%s595 + $0xf0] sm:$0xff]
  %v627 = vld [vmem:[%s595 + $0xf8] sm:$0xff]
  %v628 = vld [vmem:[%s595 + $0x100] sm:$0xff]
  %v629 = vld [vmem:[%s595 + $0x108] sm:$0xff]
  %v630 = vld [vmem:[%s595 + $0x110] sm:$0xff]
  %v631 = vld [vmem:[%s595 + $0x118] sm:$0xff]
  %v632 = vld [vmem:[%s595 + $0x120] sm:$0xff]
  %v633 = vld [vmem:[%s595 + $0x128] sm:$0xff]
  %v634 = vld [vmem:[%s595 + $0x130] sm:$0xff]
  %v635 = vld [vmem:[%s595 + $0x138] sm:$0xff]
  %v636 = vld [vmem:[%s595 + $0x140] sm:$0xff]
  %v637 = vld [vmem:[%s595 + $0x148] sm:$0xff]
  %v638 = vld [vmem:[%s595 + $0x150] sm:$0xff]
  %v639 = vld [vmem:[%s595 + $0x158] sm:$0xff]
  %v640 = vld [vmem:[%s595 + $0x160] sm:$0xff]
  %v641 = vld [vmem:[%s595 + $0x168] sm:$0xff]
  %v642 = vld [vmem:[%s595 + $0x170] sm:$0xff]
  %v643 = vld [vmem:[%s595 + $0x178] sm:$0xff]
  %v644 = vld [vmem:[%s595 + $0x180] sm:$0xff]
  %v645 = vld [vmem:[%s595 + $0x188] sm:$0xff]
  %v646 = vld [vmem:[%s595 + $0x190] sm:$0xff]
  %v647 = vld [vmem:[%s595 + $0x198] sm:$0xff]
  %v648 = vld [vmem:[%s595 + $0x1a0] sm:$0xff]
  %v649 = vld [vmem:[%s595 + $0x1a8] sm:$0xff]
  %v650 = vld [vmem:[%s595 + $0x1b0] sm:$0xff]
  %v651 = vld [vmem:[%s595 + $0x1b8] sm:$0xff]
  %v652 = vld [vmem:[%s595 + $0x1c0] sm:$0xff]
  %v653 = vld [vmem:[%s595 + $0x1c8] sm:$0xff]
  %v654 = vld [vmem:[%s595 + $0x1d0] sm:$0xff]
  %v655 = vld [vmem:[%s595 + $0x1d8] sm:$0xff]
  %v656 = vld [vmem:[%s595 + $0x1e0] sm:$0xff]
  %v657 = vld [vmem:[%s595 + $0x1e8] sm:$0xff]
  %v658 = vld [vmem:[%s595 + $0x1f0] sm:$0xff]
  %v659 = vld [vmem:[%s595 + $0x1f8] sm:$0xff]
  %s660 = scalar_lea.vmem %s4, 6
  %v661 = vld [vmem:[%s660] sm:$0x3]
  %v663 = vlaneseq
  %v664 = vshrl.u32 %v663, 7
  %v665 = vsub.s32 0, %v664
  %v666 = vrot.slane %v661, %v665
  %v667 = vlaneseq
  %v668 = vshrl.u32 %v667, 7
  %v669 = vsub.s32 1, %v668
  %v670 = vrot.slane %v661, %v669
  %673 = vmatprep.subr.mxu0 %v627
  %674 = vmatpush1.msra.mxu0 %v626
  %675 = vmatprep.subr.mxu0 %v625
  %676 = vmatpush1.msra.mxu0 %v624
  %677 = vmatprep.subr.mxu0 %v623
  %678 = vmatpush1.msra.mxu0 %v622
  %679 = vmatprep.subr.mxu0 %v621
  %680 = vmatpush1.msra.mxu0 %v620
  %681 = vmatprep.subr.mxu0 %v619
  %682 = vmatpush1.msra.mxu0 %v618
  %683 = vmatprep.subr.mxu0 %v617
  %684 = vmatpush1.msra.mxu0 %v616
  %685 = vmatprep.subr.mxu0 %v615
  %686 = vmatpush1.msra.mxu0 %v614
  %687 = vmatprep.subr.mxu0 %v613
  %688 = vmatpush1.msra.mxu0 %v612
  %689 = vmatprep.subr.mxu0 %v611
  %690 = vmatpush1.msra.mxu0 %v610
  %691 = vmatprep.subr.mxu0 %v609
  %692 = vmatpush1.msra.mxu0 %v608
  %693 = vmatprep.subr.mxu0 %v607
  %694 = vmatpush1.msra.mxu0 %v606
  %695 = vmatprep.subr.mxu0 %v605
  %696 = vmatpush1.msra.mxu0 %v604
  %697 = vmatprep.subr.mxu0 %v603
  %698 = vmatpush1.msra.mxu0 %v602
  %699 = vmatprep.subr.mxu0 %v601
  %700 = vmatpush1.msra.mxu0 %v600
  %701 = vmatprep.subr.mxu0 %v599
  %702 = vmatpush1.msra.mxu0 %v598
  %703 = vmatprep.subr.mxu0 %v597
  %704 = vmatpush1.msra.mxu0 %v596
  %705 = vmatprep.subr.mxu0 %v659
  %706 = vmatpush2.msra.mxu0 %v658
  %707 = vmatprep.subr.mxu0 %v657
  %708 = vmatpush2.msra.mxu0 %v656
  %709 = vmatprep.subr.mxu0 %v655
  %710 = vmatpush2.msra.mxu0 %v654
  %711 = vmatprep.subr.mxu0 %v653
  %712 = vmatpush2.msra.mxu0 %v652
  %713 = vmatprep.subr.mxu0 %v651
  %714 = vmatpush2.msra.mxu0 %v650
  %715 = vmatprep.subr.mxu0 %v649
  %716 = vmatpush2.msra.mxu0 %v648
  %717 = vmatprep.subr.mxu0 %v647
  %718 = vmatpush2.msra.mxu0 %v646
  %719 = vmatprep.subr.mxu0 %v645
  %720 = vmatpush2.msra.mxu0 %v644
  %721 = vmatprep.subr.mxu0 %v643
  %722 = vmatpush2.msra.mxu0 %v642
  %723 = vmatprep.subr.mxu0 %v641
  %724 = vmatpush2.msra.mxu0 %v640
  %725 = vmatprep.subr.mxu0 %v639
  %726 = vmatpush2.msra.mxu0 %v638
  %727 = vmatprep.subr.mxu0 %v637
  %728 = vmatpush2.msra.mxu0 %v636
  %729 = vmatprep.subr.mxu0 %v635
  %730 = vmatpush2.msra.mxu0 %v634
  %731 = vmatprep.subr.mxu0 %v633
  %732 = vmatpush2.msra.mxu0 %v632
  %733 = vmatprep.subr.mxu0 %v631
  %734 = vmatpush2.msra.mxu0 %v630
  %735 = vmatprep.subr.mxu0 %v629
  %736 = vmatpush2.msra.mxu0 %v628
  %737 = vmatprep.mubr.f32.mxu0 %v594
  %738 = vmatmul.mubr.f32.gmra.mxu0 %v593
  %v739 = vpop.f32.mrf.mxu0
  %v740 = vadd.f32 %v666, %v739
  %v741 = vpop.f32.mrf.mxu0
  %v742 = vadd.f32 %v670, %v741
  %743 = vdwg.mxu0
  %v744 = vmax.f32 %v740, 0.0
  %v745 = vmax.f32 %v742, 0.0
  %s746 = scalar_lea.vmem %s3, 2048
  %v747 = vld [vmem:[%s746] sm:$0xff]
  %v748 = vld [vmem:[%s746 + $0x8] sm:$0xff]
  %v749 = vld [vmem:[%s746 + $0x10] sm:$0xff]
  %v750 = vld [vmem:[%s746 + $0x18] sm:$0xff]
  %v751 = vld [vmem:[%s746 + $0x20] sm:$0xff]
  %v752 = vld [vmem:[%s746 + $0x28] sm:$0xff]
  %v753 = vld [vmem:[%s746 + $0x30] sm:$0xff]
  %v754 = vld [vmem:[%s746 + $0x38] sm:$0xff]
  %v755 = vld [vmem:[%s746 + $0x40] sm:$0xff]
  %v756 = vld [vmem:[%s746 + $0x48] sm:$0xff]
  %v757 = vld [vmem:[%s746 + $0x50] sm:$0xff]
  %v758 = vld [vmem:[%s746 + $0x58] sm:$0xff]
  %v759 = vld [vmem:[%s746 + $0x60] sm:$0xff]
  %v760 = vld [vmem:[%s746 + $0x68] sm:$0xff]
  %v761 = vld [vmem:[%s746 + $0x70] sm:$0xff]
  %v762 = vld [vmem:[%s746 + $0x78] sm:$0xff]
  %v763 = vld [vmem:[%s746 + $0x80] sm:$0xff]
  %v764 = vld [vmem:[%s746 + $0x88] sm:$0xff]
  %v765 = vld [vmem:[%s746 + $0x90] sm:$0xff]
  %v766 = vld [vmem:[%s746 + $0x98] sm:$0xff]
  %v767 = vld [vmem:[%s746 + $0xa0] sm:$0xff]
  %v768 = vld [vmem:[%s746 + $0xa8] sm:$0xff]
  %v769 = vld [vmem:[%s746 + $0xb0] sm:$0xff]
  %v770 = vld [vmem:[%s746 + $0xb8] sm:$0xff]
  %v771 = vld [vmem:[%s746 + $0xc0] sm:$0xff]
  %v772 = vld [vmem:[%s746 + $0xc8] sm:$0xff]
  %v773 = vld [vmem:[%s746 + $0xd0] sm:$0xff]
  %v774 = vld [vmem:[%s746 + $0xd8] sm:$0xff]
  %v775 = vld [vmem:[%s746 + $0xe0] sm:$0xff]
  %v776 = vld [vmem:[%s746 + $0xe8] sm:$0xff]
  %v777 = vld [vmem:[%s746 + $0xf0] sm:$0xff]
  %v778 = vld [vmem:[%s746 + $0xf8] sm:$0xff]
  %v779 = vld [vmem:[%s746 + $0x100] sm:$0xff]
  %v780 = vld [vmem:[%s746 + $0x108] sm:$0xff]
  %v781 = vld [vmem:[%s746 + $0x110] sm:$0xff]
  %v782 = vld [vmem:[%s746 + $0x118] sm:$0xff]
  %v783 = vld [vmem:[%s746 + $0x120] sm:$0xff]
  %v784 = vld [vmem:[%s746 + $0x128] sm:$0xff]
  %v785 = vld [vmem:[%s746 + $0x130] sm:$0xff]
  %v786 = vld [vmem:[%s746 + $0x138] sm:$0xff]
  %v787 = vld [vmem:[%s746 + $0x140] sm:$0xff]
  %v788 = vld [vmem:[%s746 + $0x148] sm:$0xff]
  %v789 = vld [vmem:[%s746 + $0x150] sm:$0xff]
  %v790 = vld [vmem:[%s746 + $0x158] sm:$0xff]
  %v791 = vld [vmem:[%s746 + $0x160] sm:$0xff]
  %v792 = vld [vmem:[%s746 + $0x168] sm:$0xff]
  %v793 = vld [vmem:[%s746 + $0x170] sm:$0xff]
  %v794 = vld [vmem:[%s746 + $0x178] sm:$0xff]
  %v795 = vld [vmem:[%s746 + $0x180] sm:$0xff]
  %v796 = vld [vmem:[%s746 + $0x188] sm:$0xff]
  %v797 = vld [vmem:[%s746 + $0x190] sm:$0xff]
  %v798 = vld [vmem:[%s746 + $0x198] sm:$0xff]
  %v799 = vld [vmem:[%s746 + $0x1a0] sm:$0xff]
  %v800 = vld [vmem:[%s746 + $0x1a8] sm:$0xff]
  %v801 = vld [vmem:[%s746 + $0x1b0] sm:$0xff]
  %v802 = vld [vmem:[%s746 + $0x1b8] sm:$0xff]
  %v803 = vld [vmem:[%s746 + $0x1c0] sm:$0xff]
  %v804 = vld [vmem:[%s746 + $0x1c8] sm:$0xff]
  %v805 = vld [vmem:[%s746 + $0x1d0] sm:$0xff]
  %v806 = vld [vmem:[%s746 + $0x1d8] sm:$0xff]
  %v807 = vld [vmem:[%s746 + $0x1e0] sm:$0xff]
  %v808 = vld [vmem:[%s746 + $0x1e8] sm:$0xff]
  %v809 = vld [vmem:[%s746 + $0x1f0] sm:$0xff]
  %v810 = vld [vmem:[%s746 + $0x1f8] sm:$0xff]
  %s811 = scalar_lea.vmem %s4, 8
  %v812 = vld [vmem:[%s811] sm:$0x3]
  %v814 = vlaneseq
  %v815 = vshrl.u32 %v814, 7
  %v816 = vsub.s32 0, %v815
  %v817 = vrot.slane %v812, %v816
  %v818 = vlaneseq
  %v819 = vshrl.u32 %v818, 7
  %v820 = vsub.s32 1, %v819
  %v821 = vrot.slane %v812, %v820
  %824 = vmatprep.subr.mxu0 %v778
  %825 = vmatpush1.msra.mxu0 %v777
  %826 = vmatprep.subr.mxu0 %v776
  %827 = vmatpush1.msra.mxu0 %v775
  %828 = vmatprep.subr.mxu0 %v774
  %829 = vmatpush1.msra.mxu0 %v773
  %830 = vmatprep.subr.mxu0 %v772
  %831 = vmatpush1.msra.mxu0 %v771
  %832 = vmatprep.subr.mxu0 %v770
  %833 = vmatpush1.msra.mxu0 %v769
  %834 = vmatprep.subr.mxu0 %v768
  %835 = vmatpush1.msra.mxu0 %v767
  %836 = vmatprep.subr.mxu0 %v766
  %837 = vmatpush1.msra.mxu0 %v765
  %838 = vmatprep.subr.mxu0 %v764
  %839 = vmatpush1.msra.mxu0 %v763
  %840 = vmatprep.subr.mxu0 %v762
  %841 = vmatpush1.msra.mxu0 %v761
  %842 = vmatprep.subr.mxu0 %v760
  %843 = vmatpush1.msra.mxu0 %v759
  %844 = vmatprep.subr.mxu0 %v758
  %845 = vmatpush1.msra.mxu0 %v757
  %846 = vmatprep.subr.mxu0 %v756
  %847 = vmatpush1.msra.mxu0 %v755
  %848 = vmatprep.subr.mxu0 %v754
  %849 = vmatpush1.msra.mxu0 %v753
  %850 = vmatprep.subr.mxu0 %v752
  %851 = vmatpush1.msra.mxu0 %v751
  %852 = vmatprep.subr.mxu0 %v750
  %853 = vmatpush1.msra.mxu0 %v749
  %854 = vmatprep.subr.mxu0 %v748
  %855 = vmatpush1.msra.mxu0 %v747
  %856 = vmatprep.subr.mxu0 %v810
  %857 = vmatpush2.msra.mxu0 %v809
  %858 = vmatprep.subr.mxu0 %v808
  %859 = vmatpush2.msra.mxu0 %v807
  %860 = vmatprep.subr.mxu0 %v806
  %861 = vmatpush2.msra.mxu0 %v805
  %862 = vmatprep.subr.mxu0 %v804
  %863 = vmatpush2.msra.mxu0 %v803
  %864 = vmatprep.subr.mxu0 %v802
  %865 = vmatpush2.msra.mxu0 %v801
  %866 = vmatprep.subr.mxu0 %v800
  %867 = vmatpush2.msra.mxu0 %v799
  %868 = vmatprep.subr.mxu0 %v798
  %869 = vmatpush2.msra.mxu0 %v797
  %870 = vmatprep.subr.mxu0 %v796
  %871 = vmatpush2.msra.mxu0 %v795
  %872 = vmatprep.subr.mxu0 %v794
  %873 = vmatpush2.msra.mxu0 %v793
  %874 = vmatprep.subr.mxu0 %v792
  %875 = vmatpush2.msra.mxu0 %v791
  %876 = vmatprep.subr.mxu0 %v790
  %877 = vmatpush2.msra.mxu0 %v789
  %878 = vmatprep.subr.mxu0 %v788
  %879 = vmatpush2.msra.mxu0 %v787
  %880 = vmatprep.subr.mxu0 %v786
  %881 = vmatpush2.msra.mxu0 %v785
  %882 = vmatprep.subr.mxu0 %v784
  %883 = vmatpush2.msra.mxu0 %v783
  %884 = vmatprep.subr.mxu0 %v782
  %885 = vmatpush2.msra.mxu0 %v781
  %886 = vmatprep.subr.mxu0 %v780
  %887 = vmatpush2.msra.mxu0 %v779
  %888 = vmatprep.mubr.f32.mxu0 %v745
  %889 = vmatmul.mubr.f32.gmra.mxu0 %v744
  %v890 = vpop.f32.mrf.mxu0
  %v891 = vadd.f32 %v817, %v890
  %v892 = vpop.f32.mrf.mxu0
  %v893 = vadd.f32 %v821, %v892
  %894 = vdwg.mxu0
  %v895 = vmax.f32 %v891, 0.0
  %v896 = vmax.f32 %v893, 0.0
  %s897 = scalar_lea.vmem %s3, 2560
  %v898 = vld [vmem:[%s897] sm:$0xff]
  %v899 = vld [vmem:[%s897 + $0x8] sm:$0xff]
  %v900 = vld [vmem:[%s897 + $0x10] sm:$0xff]
  %v901 = vld [vmem:[%s897 + $0x18] sm:$0xff]
  %v902 = vld [vmem:[%s897 + $0x20] sm:$0xff]
  %v903 = vld [vmem:[%s897 + $0x28] sm:$0xff]
  %v904 = vld [vmem:[%s897 + $0x30] sm:$0xff]
  %v905 = vld [vmem:[%s897 + $0x38] sm:$0xff]
  %v906 = vld [vmem:[%s897 + $0x40] sm:$0xff]
  %v907 = vld [vmem:[%s897 + $0x48] sm:$0xff]
  %v908 = vld [vmem:[%s897 + $0x50] sm:$0xff]
  %v909 = vld [vmem:[%s897 + $0x58] sm:$0xff]
  %v910 = vld [vmem:[%s897 + $0x60] sm:$0xff]
  %v911 = vld [vmem:[%s897 + $0x68] sm:$0xff]
  %v912 = vld [vmem:[%s897 + $0x70] sm:$0xff]
  %v913 = vld [vmem:[%s897 + $0x78] sm:$0xff]
  %v914 = vld [vmem:[%s897 + $0x80] sm:$0xff]
  %v915 = vld [vmem:[%s897 + $0x88] sm:$0xff]
  %v916 = vld [vmem:[%s897 + $0x90] sm:$0xff]
  %v917 = vld [vmem:[%s897 + $0x98] sm:$0xff]
  %v918 = vld [vmem:[%s897 + $0xa0] sm:$0xff]
  %v919 = vld [vmem:[%s897 + $0xa8] sm:$0xff]
  %v920 = vld [vmem:[%s897 + $0xb0] sm:$0xff]
  %v921 = vld [vmem:[%s897 + $0xb8] sm:$0xff]
  %v922 = vld [vmem:[%s897 + $0xc0] sm:$0xff]
  %v923 = vld [vmem:[%s897 + $0xc8] sm:$0xff]
  %v924 = vld [vmem:[%s897 + $0xd0] sm:$0xff]
  %v925 = vld [vmem:[%s897 + $0xd8] sm:$0xff]
  %v926 = vld [vmem:[%s897 + $0xe0] sm:$0xff]
  %v927 = vld [vmem:[%s897 + $0xe8] sm:$0xff]
  %v928 = vld [vmem:[%s897 + $0xf0] sm:$0xff]
  %v929 = vld [vmem:[%s897 + $0xf8] sm:$0xff]
  %v930 = vld [vmem:[%s897 + $0x100] sm:$0xff]
  %v931 = vld [vmem:[%s897 + $0x108] sm:$0xff]
  %v932 = vld [vmem:[%s897 + $0x110] sm:$0xff]
  %v933 = vld [vmem:[%s897 + $0x118] sm:$0xff]
  %v934 = vld [vmem:[%s897 + $0x120] sm:$0xff]
  %v935 = vld [vmem:[%s897 + $0x128] sm:$0xff]
  %v936 = vld [vmem:[%s897 + $0x130] sm:$0xff]
  %v937 = vld [vmem:[%s897 + $0x138] sm:$0xff]
  %v938 = vld [vmem:[%s897 + $0x140] sm:$0xff]
  %v939 = vld [vmem:[%s897 + $0x148] sm:$0xff]
  %v940 = vld [vmem:[%s897 + $0x150] sm:$0xff]
  %v941 = vld [vmem:[%s897 + $0x158] sm:$0xff]
  %v942 = vld [vmem:[%s897 + $0x160] sm:$0xff]
  %v943 = vld [vmem:[%s897 + $0x168] sm:$0xff]
  %v944 = vld [vmem:[%s897 + $0x170] sm:$0xff]
  %v945 = vld [vmem:[%s897 + $0x178] sm:$0xff]
  %v946 = vld [vmem:[%s897 + $0x180] sm:$0xff]
  %v947 = vld [vmem:[%s897 + $0x188] sm:$0xff]
  %v948 = vld [vmem:[%s897 + $0x190] sm:$0xff]
  %v949 = vld [vmem:[%s897 + $0x198] sm:$0xff]
  %v950 = vld [vmem:[%s897 + $0x1a0] sm:$0xff]
  %v951 = vld [vmem:[%s897 + $0x1a8] sm:$0xff]
  %v952 = vld [vmem:[%s897 + $0x1b0] sm:$0xff]
  %v953 = vld [vmem:[%s897 + $0x1b8] sm:$0xff]
  %v954 = vld [vmem:[%s897 + $0x1c0] sm:$0xff]
  %v955 = vld [vmem:[%s897 + $0x1c8] sm:$0xff]
  %v956 = vld [vmem:[%s897 + $0x1d0] sm:$0xff]
  %v957 = vld [vmem:[%s897 + $0x1d8] sm:$0xff]
  %v958 = vld [vmem:[%s897 + $0x1e0] sm:$0xff]
  %v959 = vld [vmem:[%s897 + $0x1e8] sm:$0xff]
  %v960 = vld [vmem:[%s897 + $0x1f0] sm:$0xff]
  %v961 = vld [vmem:[%s897 + $0x1f8] sm:$0xff]
  %s962 = scalar_lea.vmem %s4, 10
  %v963 = vld [vmem:[%s962] sm:$0x3]
  %v965 = vlaneseq
  %v966 = vshrl.u32 %v965, 7
  %v967 = vsub.s32 0, %v966
  %v968 = vrot.slane %v963, %v967
  %v969 = vlaneseq
  %v970 = vshrl.u32 %v969, 7
  %v971 = vsub.s32 1, %v970
  %v972 = vrot.slane %v963, %v971
  %975 = vmatprep.subr.mxu0 %v929
  %976 = vmatpush1.msra.mxu0 %v928
  %977 = vmatprep.subr.mxu0 %v927
  %978 = vmatpush1.msra.mxu0 %v926
  %979 = vmatprep.subr.mxu0 %v925
  %980 = vmatpush1.msra.mxu0 %v924
  %981 = vmatprep.subr.mxu0 %v923
  %982 = vmatpush1.msra.mxu0 %v922
  %983 = vmatprep.subr.mxu0 %v921
  %984 = vmatpush1.msra.mxu0 %v920
  %985 = vmatprep.subr.mxu0 %v919
  %986 = vmatpush1.msra.mxu0 %v918
  %987 = vmatprep.subr.mxu0 %v917
  %988 = vmatpush1.msra.mxu0 %v916
  %989 = vmatprep.subr.mxu0 %v915
  %990 = vmatpush1.msra.mxu0 %v914
  %991 = vmatprep.subr.mxu0 %v913
  %992 = vmatpush1.msra.mxu0 %v912
  %993 = vmatprep.subr.mxu0 %v911
  %994 = vmatpush1.msra.mxu0 %v910
  %995 = vmatprep.subr.mxu0 %v909
  %996 = vmatpush1.msra.mxu0 %v908
  %997 = vmatprep.subr.mxu0 %v907
  %998 = vmatpush1.msra.mxu0 %v906
  %999 = vmatprep.subr.mxu0 %v905
  %1000 = vmatpush1.msra.mxu0 %v904
  %1001 = vmatprep.subr.mxu0 %v903
  %1002 = vmatpush1.msra.mxu0 %v902
  %1003 = vmatprep.subr.mxu0 %v901
  %1004 = vmatpush1.msra.mxu0 %v900
  %1005 = vmatprep.subr.mxu0 %v899
  %1006 = vmatpush1.msra.mxu0 %v898
  %1007 = vmatprep.subr.mxu0 %v961
  %1008 = vmatpush2.msra.mxu0 %v960
  %1009 = vmatprep.subr.mxu0 %v959
  %1010 = vmatpush2.msra.mxu0 %v958
  %1011 = vmatprep.subr.mxu0 %v957
  %1012 = vmatpush2.msra.mxu0 %v956
  %1013 = vmatprep.subr.mxu0 %v955
  %1014 = vmatpush2.msra.mxu0 %v954
  %1015 = vmatprep.subr.mxu0 %v953
  %1016 = vmatpush2.msra.mxu0 %v952
  %1017 = vmatprep.subr.mxu0 %v951
  %1018 = vmatpush2.msra.mxu0 %v950
  %1019 = vmatprep.subr.mxu0 %v949
  %1020 = vmatpush2.msra.mxu0 %v948
  %1021 = vmatprep.subr.mxu0 %v947
  %1022 = vmatpush2.msra.mxu0 %v946
  %1023 = vmatprep.subr.mxu0 %v945
  %1024 = vmatpush2.msra.mxu0 %v944
  %1025 = vmatprep.subr.mxu0 %v943
  %1026 = vmatpush2.msra.mxu0 %v942
  %1027 = vmatprep.subr.mxu0 %v941
  %1028 = vmatpush2.msra.mxu0 %v940
  %1029 = vmatprep.subr.mxu0 %v939
  %1030 = vmatpush2.msra.mxu0 %v938
  %1031 = vmatprep.subr.mxu0 %v937
  %1032 = vmatpush2.msra.mxu0 %v936
  %1033 = vmatprep.subr.mxu0 %v935
  %1034 = vmatpush2.msra.mxu0 %v934
  %1035 = vmatprep.subr.mxu0 %v933
  %1036 = vmatpush2.msra.mxu0 %v932
  %1037 = vmatprep.subr.mxu0 %v931
  %1038 = vmatpush2.msra.mxu0 %v930
  %1039 = vmatprep.mubr.f32.mxu0 %v896
  %1040 = vmatmul.mubr.f32.gmra.mxu0 %v895
  %v1041 = vpop.f32.mrf.mxu0
  %v1042 = vadd.f32 %v968, %v1041
  %v1043 = vpop.f32.mrf.mxu0
  %v1044 = vadd.f32 %v972, %v1043
  %1045 = vdwg.mxu0
  %v1046 = vmax.f32 %v1042, 0.0
  %v1047 = vmax.f32 %v1044, 0.0
  %s1048 = scalar_lea.vmem %s3, 3072
  %v1049 = vld [vmem:[%s1048] sm:$0xff]
  %v1050 = vld [vmem:[%s1048 + $0x8] sm:$0xff]
  %v1051 = vld [vmem:[%s1048 + $0x10] sm:$0xff]
  %v1052 = vld [vmem:[%s1048 + $0x18] sm:$0xff]
  %v1053 = vld [vmem:[%s1048 + $0x20] sm:$0xff]
  %v1054 = vld [vmem:[%s1048 + $0x28] sm:$0xff]
  %v1055 = vld [vmem:[%s1048 + $0x30] sm:$0xff]
  %v1056 = vld [vmem:[%s1048 + $0x38] sm:$0xff]
  %v1057 = vld [vmem:[%s1048 + $0x40] sm:$0xff]
  %v1058 = vld [vmem:[%s1048 + $0x48] sm:$0xff]
  %v1059 = vld [vmem:[%s1048 + $0x50] sm:$0xff]
  %v1060 = vld [vmem:[%s1048 + $0x58] sm:$0xff]
  %v1061 = vld [vmem:[%s1048 + $0x60] sm:$0xff]
  %v1062 = vld [vmem:[%s1048 + $0x68] sm:$0xff]
  %v1063 = vld [vmem:[%s1048 + $0x70] sm:$0xff]
  %v1064 = vld [vmem:[%s1048 + $0x78] sm:$0xff]
  %v1065 = vld [vmem:[%s1048 + $0x80] sm:$0xff]
  %v1066 = vld [vmem:[%s1048 + $0x88] sm:$0xff]
  %v1067 = vld [vmem:[%s1048 + $0x90] sm:$0xff]
  %v1068 = vld [vmem:[%s1048 + $0x98] sm:$0xff]
  %v1069 = vld [vmem:[%s1048 + $0xa0] sm:$0xff]
  %v1070 = vld [vmem:[%s1048 + $0xa8] sm:$0xff]
  %v1071 = vld [vmem:[%s1048 + $0xb0] sm:$0xff]
  %v1072 = vld [vmem:[%s1048 + $0xb8] sm:$0xff]
  %v1073 = vld [vmem:[%s1048 + $0xc0] sm:$0xff]
  %v1074 = vld [vmem:[%s1048 + $0xc8] sm:$0xff]
  %v1075 = vld [vmem:[%s1048 + $0xd0] sm:$0xff]
  %v1076 = vld [vmem:[%s1048 + $0xd8] sm:$0xff]
  %v1077 = vld [vmem:[%s1048 + $0xe0] sm:$0xff]
  %v1078 = vld [vmem:[%s1048 + $0xe8] sm:$0xff]
  %v1079 = vld [vmem:[%s1048 + $0xf0] sm:$0xff]
  %v1080 = vld [vmem:[%s1048 + $0xf8] sm:$0xff]
  %v1081 = vld [vmem:[%s1048 + $0x100] sm:$0xff]
  %v1082 = vld [vmem:[%s1048 + $0x108] sm:$0xff]
  %v1083 = vld [vmem:[%s1048 + $0x110] sm:$0xff]
  %v1084 = vld [vmem:[%s1048 + $0x118] sm:$0xff]
  %v1085 = vld [vmem:[%s1048 + $0x120] sm:$0xff]
  %v1086 = vld [vmem:[%s1048 + $0x128] sm:$0xff]
  %v1087 = vld [vmem:[%s1048 + $0x130] sm:$0xff]
  %v1088 = vld [vmem:[%s1048 + $0x138] sm:$0xff]
  %v1089 = vld [vmem:[%s1048 + $0x140] sm:$0xff]
  %v1090 = vld [vmem:[%s1048 + $0x148] sm:$0xff]
  %v1091 = vld [vmem:[%s1048 + $0x150] sm:$0xff]
  %v1092 = vld [vmem:[%s1048 + $0x158] sm:$0xff]
  %v1093 = vld [vmem:[%s1048 + $0x160] sm:$0xff]
  %v1094 = vld [vmem:[%s1048 + $0x168] sm:$0xff]
  %v1095 = vld [vmem:[%s1048 + $0x170] sm:$0xff]
  %v1096 = vld [vmem:[%s1048 + $0x178] sm:$0xff]
  %v1097 = vld [vmem:[%s1048 + $0x180] sm:$0xff]
  %v1098 = vld [vmem:[%s1048 + $0x188] sm:$0xff]
  %v1099 = vld [vmem:[%s1048 + $0x190] sm:$0xff]
  %v1100 = vld [vmem:[%s1048 + $0x198] sm:$0xff]
  %v1101 = vld [vmem:[%s1048 + $0x1a0] sm:$0xff]
  %v1102 = vld [vmem:[%s1048 + $0x1a8] sm:$0xff]
  %v1103 = vld [vmem:[%s1048 + $0x1b0] sm:$0xff]
  %v1104 = vld [vmem:[%s1048 + $0x1b8] sm:$0xff]
  %v1105 = vld [vmem:[%s1048 + $0x1c0] sm:$0xff]
  %v1106 = vld [vmem:[%s1048 + $0x1c8] sm:$0xff]
  %v1107 = vld [vmem:[%s1048 + $0x1d0] sm:$0xff]
  %v1108 = vld [vmem:[%s1048 + $0x1d8] sm:$0xff]
  %v1109 = vld [vmem:[%s1048 + $0x1e0] sm:$0xff]
  %v1110 = vld [vmem:[%s1048 + $0x1e8] sm:$0xff]
  %v1111 = vld [vmem:[%s1048 + $0x1f0] sm:$0xff]
  %v1112 = vld [vmem:[%s1048 + $0x1f8] sm:$0xff]
  %s1113 = scalar_lea.vmem %s4, 12
  %v1114 = vld [vmem:[%s1113] sm:$0x3]
  %v1116 = vlaneseq
  %v1117 = vshrl.u32 %v1116, 7
  %v1118 = vsub.s32 0, %v1117
  %v1119 = vrot.slane %v1114, %v1118
  %v1120 = vlaneseq
  %v1121 = vshrl.u32 %v1120, 7
  %v1122 = vsub.s32 1, %v1121
  %v1123 = vrot.slane %v1114, %v1122
  %1126 = vmatprep.subr.mxu0 %v1080
  %1127 = vmatpush1.msra.mxu0 %v1079
  %1128 = vmatprep.subr.mxu0 %v1078
  %1129 = vmatpush1.msra.mxu0 %v1077
  %1130 = vmatprep.subr.mxu0 %v1076
  %1131 = vmatpush1.msra.mxu0 %v1075
  %1132 = vmatprep.subr.mxu0 %v1074
  %1133 = vmatpush1.msra.mxu0 %v1073
  %1134 = vmatprep.subr.mxu0 %v1072
  %1135 = vmatpush1.msra.mxu0 %v1071
  %1136 = vmatprep.subr.mxu0 %v1070
  %1137 = vmatpush1.msra.mxu0 %v1069
  %1138 = vmatprep.subr.mxu0 %v1068
  %1139 = vmatpush1.msra.mxu0 %v1067
  %1140 = vmatprep.subr.mxu0 %v1066
  %1141 = vmatpush1.msra.mxu0 %v1065
  %1142 = vmatprep.subr.mxu0 %v1064
  %1143 = vmatpush1.msra.mxu0 %v1063
  %1144 = vmatprep.subr.mxu0 %v1062
  %1145 = vmatpush1.msra.mxu0 %v1061
  %1146 = vmatprep.subr.mxu0 %v1060
  %1147 = vmatpush1.msra.mxu0 %v1059
  %1148 = vmatprep.subr.mxu0 %v1058
  %1149 = vmatpush1.msra.mxu0 %v1057
  %1150 = vmatprep.subr.mxu0 %v1056
  %1151 = vmatpush1.msra.mxu0 %v1055
  %1152 = vmatprep.subr.mxu0 %v1054
  %1153 = vmatpush1.msra.mxu0 %v1053
  %1154 = vmatprep.subr.mxu0 %v1052
  %1155 = vmatpush1.msra.mxu0 %v1051
  %1156 = vmatprep.subr.mxu0 %v1050
  %1157 = vmatpush1.msra.mxu0 %v1049
  %1158 = vmatprep.subr.mxu0 %v1112
  %1159 = vmatpush2.msra.mxu0 %v1111
  %1160 = vmatprep.subr.mxu0 %v1110
  %1161 = vmatpush2.msra.mxu0 %v1109
  %1162 = vmatprep.subr.mxu0 %v1108
  %1163 = vmatpush2.msra.mxu0 %v1107
  %1164 = vmatprep.subr.mxu0 %v1106
  %1165 = vmatpush2.msra.mxu0 %v1105
  %1166 = vmatprep.subr.mxu0 %v1104
  %1167 = vmatpush2.msra.mxu0 %v1103
  %1168 = vmatprep.subr.mxu0 %v1102
  %1169 = vmatpush2.msra.mxu0 %v1101
  %1170 = vmatprep.subr.mxu0 %v1100
  %1171 = vmatpush2.msra.mxu0 %v1099
  %1172 = vmatprep.subr.mxu0 %v1098
  %1173 = vmatpush2.msra.mxu0 %v1097
  %1174 = vmatprep.subr.mxu0 %v1096
  %1175 = vmatpush2.msra.mxu0 %v1095
  %1176 = vmatprep.subr.mxu0 %v1094
  %1177 = vmatpush2.msra.mxu0 %v1093
  %1178 = vmatprep.subr.mxu0 %v1092
  %1179 = vmatpush2.msra.mxu0 %v1091
  %1180 = vmatprep.subr.mxu0 %v1090
  %1181 = vmatpush2.msra.mxu0 %v1089
  %1182 = vmatprep.subr.mxu0 %v1088
  %1183 = vmatpush2.msra.mxu0 %v1087
  %1184 = vmatprep.subr.mxu0 %v1086
  %1185 = vmatpush2.msra.mxu0 %v1085
  %1186 = vmatprep.subr.mxu0 %v1084
  %1187 = vmatpush2.msra.mxu0 %v1083
  %1188 = vmatprep.subr.mxu0 %v1082
  %1189 = vmatpush2.msra.mxu0 %v1081
  %1190 = vmatprep.mubr.f32.mxu0 %v1047
  %1191 = vmatmul.mubr.f32.gmra.mxu0 %v1046
  %v1192 = vpop.f32.mrf.mxu0
  %v1193 = vadd.f32 %v1119, %v1192
  %v1194 = vpop.f32.mrf.mxu0
  %v1195 = vadd.f32 %v1123, %v1194
  %1196 = vdwg.mxu0
  %v1197 = vmax.f32 %v1193, 0.0
  %v1198 = vmax.f32 %v1195, 0.0
  %s1199 = scalar_lea.vmem %s3, 3584
  %v1200 = vld [vmem:[%s1199] sm:$0xff]
  %v1201 = vld [vmem:[%s1199 + $0x8] sm:$0xff]
  %v1202 = vld [vmem:[%s1199 + $0x10] sm:$0xff]
  %v1203 = vld [vmem:[%s1199 + $0x18] sm:$0xff]
  %v1204 = vld [vmem:[%s1199 + $0x20] sm:$0xff]
  %v1205 = vld [vmem:[%s1199 + $0x28] sm:$0xff]
  %v1206 = vld [vmem:[%s1199 + $0x30] sm:$0xff]
  %v1207 = vld [vmem:[%s1199 + $0x38] sm:$0xff]
  %v1208 = vld [vmem:[%s1199 + $0x40] sm:$0xff]
  %v1209 = vld [vmem:[%s1199 + $0x48] sm:$0xff]
  %v1210 = vld [vmem:[%s1199 + $0x50] sm:$0xff]
  %v1211 = vld [vmem:[%s1199 + $0x58] sm:$0xff]
  %v1212 = vld [vmem:[%s1199 + $0x60] sm:$0xff]
  %v1213 = vld [vmem:[%s1199 + $0x68] sm:$0xff]
  %v1214 = vld [vmem:[%s1199 + $0x70] sm:$0xff]
  %v1215 = vld [vmem:[%s1199 + $0x78] sm:$0xff]
  %v1216 = vld [vmem:[%s1199 + $0x80] sm:$0xff]
  %v1217 = vld [vmem:[%s1199 + $0x88] sm:$0xff]
  %v1218 = vld [vmem:[%s1199 + $0x90] sm:$0xff]
  %v1219 = vld [vmem:[%s1199 + $0x98] sm:$0xff]
  %v1220 = vld [vmem:[%s1199 + $0xa0] sm:$0xff]
  %v1221 = vld [vmem:[%s1199 + $0xa8] sm:$0xff]
  %v1222 = vld [vmem:[%s1199 + $0xb0] sm:$0xff]
  %v1223 = vld [vmem:[%s1199 + $0xb8] sm:$0xff]
  %v1224 = vld [vmem:[%s1199 + $0xc0] sm:$0xff]
  %v1225 = vld [vmem:[%s1199 + $0xc8] sm:$0xff]
  %v1226 = vld [vmem:[%s1199 + $0xd0] sm:$0xff]
  %v1227 = vld [vmem:[%s1199 + $0xd8] sm:$0xff]
  %v1228 = vld [vmem:[%s1199 + $0xe0] sm:$0xff]
  %v1229 = vld [vmem:[%s1199 + $0xe8] sm:$0xff]
  %v1230 = vld [vmem:[%s1199 + $0xf0] sm:$0xff]
  %v1231 = vld [vmem:[%s1199 + $0xf8] sm:$0xff]
  %v1232 = vld [vmem:[%s1199 + $0x100] sm:$0xff]
  %v1233 = vld [vmem:[%s1199 + $0x108] sm:$0xff]
  %v1234 = vld [vmem:[%s1199 + $0x110] sm:$0xff]
  %v1235 = vld [vmem:[%s1199 + $0x118] sm:$0xff]
  %v1236 = vld [vmem:[%s1199 + $0x120] sm:$0xff]
  %v1237 = vld [vmem:[%s1199 + $0x128] sm:$0xff]
  %v1238 = vld [vmem:[%s1199 + $0x130] sm:$0xff]
  %v1239 = vld [vmem:[%s1199 + $0x138] sm:$0xff]
  %v1240 = vld [vmem:[%s1199 + $0x140] sm:$0xff]
  %v1241 = vld [vmem:[%s1199 + $0x148] sm:$0xff]
  %v1242 = vld [vmem:[%s1199 + $0x150] sm:$0xff]
  %v1243 = vld [vmem:[%s1199 + $0x158] sm:$0xff]
  %v1244 = vld [vmem:[%s1199 + $0x160] sm:$0xff]
  %v1245 = vld [vmem:[%s1199 + $0x168] sm:$0xff]
  %v1246 = vld [vmem:[%s1199 + $0x170] sm:$0xff]
  %v1247 = vld [vmem:[%s1199 + $0x178] sm:$0xff]
  %v1248 = vld [vmem:[%s1199 + $0x180] sm:$0xff]
  %v1249 = vld [vmem:[%s1199 + $0x188] sm:$0xff]
  %v1250 = vld [vmem:[%s1199 + $0x190] sm:$0xff]
  %v1251 = vld [vmem:[%s1199 + $0x198] sm:$0xff]
  %v1252 = vld [vmem:[%s1199 + $0x1a0] sm:$0xff]
  %v1253 = vld [vmem:[%s1199 + $0x1a8] sm:$0xff]
  %v1254 = vld [vmem:[%s1199 + $0x1b0] sm:$0xff]
  %v1255 = vld [vmem:[%s1199 + $0x1b8] sm:$0xff]
  %v1256 = vld [vmem:[%s1199 + $0x1c0] sm:$0xff]
  %v1257 = vld [vmem:[%s1199 + $0x1c8] sm:$0xff]
  %v1258 = vld [vmem:[%s1199 + $0x1d0] sm:$0xff]
  %v1259 = vld [vmem:[%s1199 + $0x1d8] sm:$0xff]
  %v1260 = vld [vmem:[%s1199 + $0x1e0] sm:$0xff]
  %v1261 = vld [vmem:[%s1199 + $0x1e8] sm:$0xff]
  %v1262 = vld [vmem:[%s1199 + $0x1f0] sm:$0xff]
  %v1263 = vld [vmem:[%s1199 + $0x1f8] sm:$0xff]
  %s1264 = scalar_lea.vmem %s4, 14
  %v1265 = vld [vmem:[%s1264] sm:$0x3]
  %v1267 = vlaneseq
  %v1268 = vshrl.u32 %v1267, 7
  %v1269 = vsub.s32 0, %v1268
  %v1270 = vrot.slane %v1265, %v1269
  %v1271 = vlaneseq
  %v1272 = vshrl.u32 %v1271, 7
  %v1273 = vsub.s32 1, %v1272
  %v1274 = vrot.slane %v1265, %v1273
  %1277 = vmatprep.subr.mxu0 %v1231
  %1278 = vmatpush1.msra.mxu0 %v1230
  %1279 = vmatprep.subr.mxu0 %v1229
  %1280 = vmatpush1.msra.mxu0 %v1228
  %1281 = vmatprep.subr.mxu0 %v1227
  %1282 = vmatpush1.msra.mxu0 %v1226
  %1283 = vmatprep.subr.mxu0 %v1225
  %1284 = vmatpush1.msra.mxu0 %v1224
  %1285 = vmatprep.subr.mxu0 %v1223
  %1286 = vmatpush1.msra.mxu0 %v1222
  %1287 = vmatprep.subr.mxu0 %v1221
  %1288 = vmatpush1.msra.mxu0 %v1220
  %1289 = vmatprep.subr.mxu0 %v1219
  %1290 = vmatpush1.msra.mxu0 %v1218
  %1291 = vmatprep.subr.mxu0 %v1217
  %1292 = vmatpush1.msra.mxu0 %v1216
  %1293 = vmatprep.subr.mxu0 %v1215
  %1294 = vmatpush1.msra.mxu0 %v1214
  %1295 = vmatprep.subr.mxu0 %v1213
  %1296 = vmatpush1.msra.mxu0 %v1212
  %1297 = vmatprep.subr.mxu0 %v1211
  %1298 = vmatpush1.msra.mxu0 %v1210
  %1299 = vmatprep.subr.mxu0 %v1209
  %1300 = vmatpush1.msra.mxu0 %v1208
  %1301 = vmatprep.subr.mxu0 %v1207
  %1302 = vmatpush1.msra.mxu0 %v1206
  %1303 = vmatprep.subr.mxu0 %v1205
  %1304 = vmatpush1.msra.mxu0 %v1204
  %1305 = vmatprep.subr.mxu0 %v1203
  %1306 = vmatpush1.msra.mxu0 %v1202
  %1307 = vmatprep.subr.mxu0 %v1201
  %1308 = vmatpush1.msra.mxu0 %v1200
  %1309 = vmatprep.subr.mxu0 %v1263
  %1310 = vmatpush2.msra.mxu0 %v1262
  %1311 = vmatprep.subr.mxu0 %v1261
  %1312 = vmatpush2.msra.mxu0 %v1260
  %1313 = vmatprep.subr.mxu0 %v1259
  %1314 = vmatpush2.msra.mxu0 %v1258
  %1315 = vmatprep.subr.mxu0 %v1257
  %1316 = vmatpush2.msra.mxu0 %v1256
  %1317 = vmatprep.subr.mxu0 %v1255
  %1318 = vmatpush2.msra.mxu0 %v1254
  %1319 = vmatprep.subr.mxu0 %v1253
  %1320 = vmatpush2.msra.mxu0 %v1252
  %1321 = vmatprep.subr.mxu0 %v1251
  %1322 = vmatpush2.msra.mxu0 %v1250
  %1323 = vmatprep.subr.mxu0 %v1249
  %1324 = vmatpush2.msra.mxu0 %v1248
  %1325 = vmatprep.subr.mxu0 %v1247
  %1326 = vmatpush2.msra.mxu0 %v1246
  %1327 = vmatprep.subr.mxu0 %v1245
  %1328 = vmatpush2.msra.mxu0 %v1244
  %1329 = vmatprep.subr.mxu0 %v1243
  %1330 = vmatpush2.msra.mxu0 %v1242
  %1331 = vmatprep.subr.mxu0 %v1241
  %1332 = vmatpush2.msra.mxu0 %v1240
  %1333 = vmatprep.subr.mxu0 %v1239
  %1334 = vmatpush2.msra.mxu0 %v1238
  %1335 = vmatprep.subr.mxu0 %v1237
  %1336 = vmatpush2.msra.mxu0 %v1236
  %1337 = vmatprep.subr.mxu0 %v1235
  %1338 = vmatpush2.msra.mxu0 %v1234
  %1339 = vmatprep.subr.mxu0 %v1233
  %1340 = vmatpush2.msra.mxu0 %v1232
  %1341 = vmatprep.mubr.f32.mxu0 %v1198
  %1342 = vmatmul.mubr.f32.gmra.mxu0 %v1197
  %v1343 = vpop.f32.mrf.mxu0
  %v1344 = vadd.f32 %v1270, %v1343
  %v1345 = vpop.f32.mrf.mxu0
  %v1346 = vadd.f32 %v1274, %v1345
  %1347 = vdwg.mxu0
  %v1348 = vmax.f32 %v1344, 0.0
  %v1349 = vmax.f32 %v1346, 0.0
  %s1350 = scalar_lea.vmem %s3, 4096
  %v1351 = vld [vmem:[%s1350] sm:$0xff]
  %v1352 = vld [vmem:[%s1350 + $0x8] sm:$0xff]
  %v1353 = vld [vmem:[%s1350 + $0x10] sm:$0xff]
  %v1354 = vld [vmem:[%s1350 + $0x18] sm:$0xff]
  %v1355 = vld [vmem:[%s1350 + $0x20] sm:$0xff]
  %v1356 = vld [vmem:[%s1350 + $0x28] sm:$0xff]
  %v1357 = vld [vmem:[%s1350 + $0x30] sm:$0xff]
  %v1358 = vld [vmem:[%s1350 + $0x38] sm:$0xff]
  %v1359 = vld [vmem:[%s1350 + $0x40] sm:$0xff]
  %v1360 = vld [vmem:[%s1350 + $0x48] sm:$0xff]
  %v1361 = vld [vmem:[%s1350 + $0x50] sm:$0xff]
  %v1362 = vld [vmem:[%s1350 + $0x58] sm:$0xff]
  %v1363 = vld [vmem:[%s1350 + $0x60] sm:$0xff]
  %v1364 = vld [vmem:[%s1350 + $0x68] sm:$0xff]
  %v1365 = vld [vmem:[%s1350 + $0x70] sm:$0xff]
  %v1366 = vld [vmem:[%s1350 + $0x78] sm:$0xff]
  %v1367 = vld [vmem:[%s1350 + $0x80] sm:$0xff]
  %v1368 = vld [vmem:[%s1350 + $0x88] sm:$0xff]
  %v1369 = vld [vmem:[%s1350 + $0x90] sm:$0xff]
  %v1370 = vld [vmem:[%s1350 + $0x98] sm:$0xff]
  %v1371 = vld [vmem:[%s1350 + $0xa0] sm:$0xff]
  %v1372 = vld [vmem:[%s1350 + $0xa8] sm:$0xff]
  %v1373 = vld [vmem:[%s1350 + $0xb0] sm:$0xff]
  %v1374 = vld [vmem:[%s1350 + $0xb8] sm:$0xff]
  %v1375 = vld [vmem:[%s1350 + $0xc0] sm:$0xff]
  %v1376 = vld [vmem:[%s1350 + $0xc8] sm:$0xff]
  %v1377 = vld [vmem:[%s1350 + $0xd0] sm:$0xff]
  %v1378 = vld [vmem:[%s1350 + $0xd8] sm:$0xff]
  %v1379 = vld [vmem:[%s1350 + $0xe0] sm:$0xff]
  %v1380 = vld [vmem:[%s1350 + $0xe8] sm:$0xff]
  %v1381 = vld [vmem:[%s1350 + $0xf0] sm:$0xff]
  %v1382 = vld [vmem:[%s1350 + $0xf8] sm:$0xff]
  %v1383 = vld [vmem:[%s1350 + $0x100] sm:$0xff]
  %v1384 = vld [vmem:[%s1350 + $0x108] sm:$0xff]
  %v1385 = vld [vmem:[%s1350 + $0x110] sm:$0xff]
  %v1386 = vld [vmem:[%s1350 + $0x118] sm:$0xff]
  %v1387 = vld [vmem:[%s1350 + $0x120] sm:$0xff]
  %v1388 = vld [vmem:[%s1350 + $0x128] sm:$0xff]
  %v1389 = vld [vmem:[%s1350 + $0x130] sm:$0xff]
  %v1390 = vld [vmem:[%s1350 + $0x138] sm:$0xff]
  %v1391 = vld [vmem:[%s1350 + $0x140] sm:$0xff]
  %v1392 = vld [vmem:[%s1350 + $0x148] sm:$0xff]
  %v1393 = vld [vmem:[%s1350 + $0x150] sm:$0xff]
  %v1394 = vld [vmem:[%s1350 + $0x158] sm:$0xff]
  %v1395 = vld [vmem:[%s1350 + $0x160] sm:$0xff]
  %v1396 = vld [vmem:[%s1350 + $0x168] sm:$0xff]
  %v1397 = vld [vmem:[%s1350 + $0x170] sm:$0xff]
  %v1398 = vld [vmem:[%s1350 + $0x178] sm:$0xff]
  %v1399 = vld [vmem:[%s1350 + $0x180] sm:$0xff]
  %v1400 = vld [vmem:[%s1350 + $0x188] sm:$0xff]
  %v1401 = vld [vmem:[%s1350 + $0x190] sm:$0xff]
  %v1402 = vld [vmem:[%s1350 + $0x198] sm:$0xff]
  %v1403 = vld [vmem:[%s1350 + $0x1a0] sm:$0xff]
  %v1404 = vld [vmem:[%s1350 + $0x1a8] sm:$0xff]
  %v1405 = vld [vmem:[%s1350 + $0x1b0] sm:$0xff]
  %v1406 = vld [vmem:[%s1350 + $0x1b8] sm:$0xff]
  %v1407 = vld [vmem:[%s1350 + $0x1c0] sm:$0xff]
  %v1408 = vld [vmem:[%s1350 + $0x1c8] sm:$0xff]
  %v1409 = vld [vmem:[%s1350 + $0x1d0] sm:$0xff]
  %v1410 = vld [vmem:[%s1350 + $0x1d8] sm:$0xff]
  %v1411 = vld [vmem:[%s1350 + $0x1e0] sm:$0xff]
  %v1412 = vld [vmem:[%s1350 + $0x1e8] sm:$0xff]
  %v1413 = vld [vmem:[%s1350 + $0x1f0] sm:$0xff]
  %v1414 = vld [vmem:[%s1350 + $0x1f8] sm:$0xff]
  %s1415 = scalar_lea.vmem %s4, 16
  %v1416 = vld [vmem:[%s1415] sm:$0x3]
  %v1418 = vlaneseq
  %v1419 = vshrl.u32 %v1418, 7
  %v1420 = vsub.s32 0, %v1419
  %v1421 = vrot.slane %v1416, %v1420
  %v1422 = vlaneseq
  %v1423 = vshrl.u32 %v1422, 7
  %v1424 = vsub.s32 1, %v1423
  %v1425 = vrot.slane %v1416, %v1424
  %1428 = vmatprep.subr.mxu0 %v1382
  %1429 = vmatpush1.msra.mxu0 %v1381
  %1430 = vmatprep.subr.mxu0 %v1380
  %1431 = vmatpush1.msra.mxu0 %v1379
  %1432 = vmatprep.subr.mxu0 %v1378
  %1433 = vmatpush1.msra.mxu0 %v1377
  %1434 = vmatprep.subr.mxu0 %v1376
  %1435 = vmatpush1.msra.mxu0 %v1375
  %1436 = vmatprep.subr.mxu0 %v1374
  %1437 = vmatpush1.msra.mxu0 %v1373
  %1438 = vmatprep.subr.mxu0 %v1372
  %1439 = vmatpush1.msra.mxu0 %v1371
  %1440 = vmatprep.subr.mxu0 %v1370
  %1441 = vmatpush1.msra.mxu0 %v1369
  %1442 = vmatprep.subr.mxu0 %v1368
  %1443 = vmatpush1.msra.mxu0 %v1367
  %1444 = vmatprep.subr.mxu0 %v1366
  %1445 = vmatpush1.msra.mxu0 %v1365
  %1446 = vmatprep.subr.mxu0 %v1364
  %1447 = vmatpush1.msra.mxu0 %v1363
  %1448 = vmatprep.subr.mxu0 %v1362
  %1449 = vmatpush1.msra.mxu0 %v1361
  %1450 = vmatprep.subr.mxu0 %v1360
  %1451 = vmatpush1.msra.mxu0 %v1359
  %1452 = vmatprep.subr.mxu0 %v1358
  %1453 = vmatpush1.msra.mxu0 %v1357
  %1454 = vmatprep.subr.mxu0 %v1356
  %1455 = vmatpush1.msra.mxu0 %v1355
  %1456 = vmatprep.subr.mxu0 %v1354
  %1457 = vmatpush1.msra.mxu0 %v1353
  %1458 = vmatprep.subr.mxu0 %v1352
  %1459 = vmatpush1.msra.mxu0 %v1351
  %1460 = vmatprep.subr.mxu0 %v1414
  %1461 = vmatpush2.msra.mxu0 %v1413
  %1462 = vmatprep.subr.mxu0 %v1412
  %1463 = vmatpush2.msra.mxu0 %v1411
  %1464 = vmatprep.subr.mxu0 %v1410
  %1465 = vmatpush2.msra.mxu0 %v1409
  %1466 = vmatprep.subr.mxu0 %v1408
  %1467 = vmatpush2.msra.mxu0 %v1407
  %1468 = vmatprep.subr.mxu0 %v1406
  %1469 = vmatpush2.msra.mxu0 %v1405
  %1470 = vmatprep.subr.mxu0 %v1404
  %1471 = vmatpush2.msra.mxu0 %v1403
  %1472 = vmatprep.subr.mxu0 %v1402
  %1473 = vmatpush2.msra.mxu0 %v1401
  %1474 = vmatprep.subr.mxu0 %v1400
  %1475 = vmatpush2.msra.mxu0 %v1399
  %1476 = vmatprep.subr.mxu0 %v1398
  %1477 = vmatpush2.msra.mxu0 %v1397
  %1478 = vmatprep.subr.mxu0 %v1396
  %1479 = vmatpush2.msra.mxu0 %v1395
  %1480 = vmatprep.subr.mxu0 %v1394
  %1481 = vmatpush2.msra.mxu0 %v1393
  %1482 = vmatprep.subr.mxu0 %v1392
  %1483 = vmatpush2.msra.mxu0 %v1391
  %1484 = vmatprep.subr.mxu0 %v1390
  %1485 = vmatpush2.msra.mxu0 %v1389
  %1486 = vmatprep.subr.mxu0 %v1388
  %1487 = vmatpush2.msra.mxu0 %v1387
  %1488 = vmatprep.subr.mxu0 %v1386
  %1489 = vmatpush2.msra.mxu0 %v1385
  %1490 = vmatprep.subr.mxu0 %v1384
  %1491 = vmatpush2.msra.mxu0 %v1383
  %1492 = vmatprep.mubr.f32.mxu0 %v1349
  %1493 = vmatmul.mubr.f32.gmra.mxu0 %v1348
  %v1494 = vpop.f32.mrf.mxu0
  %v1495 = vadd.f32 %v1421, %v1494
  %v1496 = vpop.f32.mrf.mxu0
  %v1497 = vadd.f32 %v1425, %v1496
  %1498 = vdwg.mxu0
  %v1499 = vmax.f32 %v1495, 0.0
  %v1500 = vmax.f32 %v1497, 0.0
  %s1501 = scalar_lea.vmem %s3, 4608
  %v1502 = vld [vmem:[%s1501] sm:$0xff]
  %v1503 = vld [vmem:[%s1501 + $0x8] sm:$0xff]
  %v1504 = vld [vmem:[%s1501 + $0x10] sm:$0xff]
  %v1505 = vld [vmem:[%s1501 + $0x18] sm:$0xff]
  %v1506 = vld [vmem:[%s1501 + $0x20] sm:$0xff]
  %v1507 = vld [vmem:[%s1501 + $0x28] sm:$0xff]
  %v1508 = vld [vmem:[%s1501 + $0x30] sm:$0xff]
  %v1509 = vld [vmem:[%s1501 + $0x38] sm:$0xff]
  %v1510 = vld [vmem:[%s1501 + $0x40] sm:$0xff]
  %v1511 = vld [vmem:[%s1501 + $0x48] sm:$0xff]
  %v1512 = vld [vmem:[%s1501 + $0x50] sm:$0xff]
  %v1513 = vld [vmem:[%s1501 + $0x58] sm:$0xff]
  %v1514 = vld [vmem:[%s1501 + $0x60] sm:$0xff]
  %v1515 = vld [vmem:[%s1501 + $0x68] sm:$0xff]
  %v1516 = vld [vmem:[%s1501 + $0x70] sm:$0xff]
  %v1517 = vld [vmem:[%s1501 + $0x78] sm:$0xff]
  %v1518 = vld [vmem:[%s1501 + $0x80] sm:$0xff]
  %v1519 = vld [vmem:[%s1501 + $0x88] sm:$0xff]
  %v1520 = vld [vmem:[%s1501 + $0x90] sm:$0xff]
  %v1521 = vld [vmem:[%s1501 + $0x98] sm:$0xff]
  %v1522 = vld [vmem:[%s1501 + $0xa0] sm:$0xff]
  %v1523 = vld [vmem:[%s1501 + $0xa8] sm:$0xff]
  %v1524 = vld [vmem:[%s1501 + $0xb0] sm:$0xff]
  %v1525 = vld [vmem:[%s1501 + $0xb8] sm:$0xff]
  %v1526 = vld [vmem:[%s1501 + $0xc0] sm:$0xff]
  %v1527 = vld [vmem:[%s1501 + $0xc8] sm:$0xff]
  %v1528 = vld [vmem:[%s1501 + $0xd0] sm:$0xff]
  %v1529 = vld [vmem:[%s1501 + $0xd8] sm:$0xff]
  %v1530 = vld [vmem:[%s1501 + $0xe0] sm:$0xff]
  %v1531 = vld [vmem:[%s1501 + $0xe8] sm:$0xff]
  %v1532 = vld [vmem:[%s1501 + $0xf0] sm:$0xff]
  %v1533 = vld [vmem:[%s1501 + $0xf8] sm:$0xff]
  %v1534 = vld [vmem:[%s1501 + $0x100] sm:$0xff]
  %v1535 = vld [vmem:[%s1501 + $0x108] sm:$0xff]
  %v1536 = vld [vmem:[%s1501 + $0x110] sm:$0xff]
  %v1537 = vld [vmem:[%s1501 + $0x118] sm:$0xff]
  %v1538 = vld [vmem:[%s1501 + $0x120] sm:$0xff]
  %v1539 = vld [vmem:[%s1501 + $0x128] sm:$0xff]
  %v1540 = vld [vmem:[%s1501 + $0x130] sm:$0xff]
  %v1541 = vld [vmem:[%s1501 + $0x138] sm:$0xff]
  %v1542 = vld [vmem:[%s1501 + $0x140] sm:$0xff]
  %v1543 = vld [vmem:[%s1501 + $0x148] sm:$0xff]
  %v1544 = vld [vmem:[%s1501 + $0x150] sm:$0xff]
  %v1545 = vld [vmem:[%s1501 + $0x158] sm:$0xff]
  %v1546 = vld [vmem:[%s1501 + $0x160] sm:$0xff]
  %v1547 = vld [vmem:[%s1501 + $0x168] sm:$0xff]
  %v1548 = vld [vmem:[%s1501 + $0x170] sm:$0xff]
  %v1549 = vld [vmem:[%s1501 + $0x178] sm:$0xff]
  %v1550 = vld [vmem:[%s1501 + $0x180] sm:$0xff]
  %v1551 = vld [vmem:[%s1501 + $0x188] sm:$0xff]
  %v1552 = vld [vmem:[%s1501 + $0x190] sm:$0xff]
  %v1553 = vld [vmem:[%s1501 + $0x198] sm:$0xff]
  %v1554 = vld [vmem:[%s1501 + $0x1a0] sm:$0xff]
  %v1555 = vld [vmem:[%s1501 + $0x1a8] sm:$0xff]
  %v1556 = vld [vmem:[%s1501 + $0x1b0] sm:$0xff]
  %v1557 = vld [vmem:[%s1501 + $0x1b8] sm:$0xff]
  %v1558 = vld [vmem:[%s1501 + $0x1c0] sm:$0xff]
  %v1559 = vld [vmem:[%s1501 + $0x1c8] sm:$0xff]
  %v1560 = vld [vmem:[%s1501 + $0x1d0] sm:$0xff]
  %v1561 = vld [vmem:[%s1501 + $0x1d8] sm:$0xff]
  %v1562 = vld [vmem:[%s1501 + $0x1e0] sm:$0xff]
  %v1563 = vld [vmem:[%s1501 + $0x1e8] sm:$0xff]
  %v1564 = vld [vmem:[%s1501 + $0x1f0] sm:$0xff]
  %v1565 = vld [vmem:[%s1501 + $0x1f8] sm:$0xff]
  %s1566 = scalar_lea.vmem %s4, 18
  %v1567 = vld [vmem:[%s1566] sm:$0x3]
  %v1569 = vlaneseq
  %v1570 = vshrl.u32 %v1569, 7
  %v1571 = vsub.s32 0, %v1570
  %v1572 = vrot.slane %v1567, %v1571
  %v1573 = vlaneseq
  %v1574 = vshrl.u32 %v1573, 7
  %v1575 = vsub.s32 1, %v1574
  %v1576 = vrot.slane %v1567, %v1575
  %1579 = vmatprep.subr.mxu0 %v1533
  %1580 = vmatpush1.msra.mxu0 %v1532
  %1581 = vmatprep.subr.mxu0 %v1531
  %1582 = vmatpush1.msra.mxu0 %v1530
  %1583 = vmatprep.subr.mxu0 %v1529
  %1584 = vmatpush1.msra.mxu0 %v1528
  %1585 = vmatprep.subr.mxu0 %v1527
  %1586 = vmatpush1.msra.mxu0 %v1526
  %1587 = vmatprep.subr.mxu0 %v1525
  %1588 = vmatpush1.msra.mxu0 %v1524
  %1589 = vmatprep.subr.mxu0 %v1523
  %1590 = vmatpush1.msra.mxu0 %v1522
  %1591 = vmatprep.subr.mxu0 %v1521
  %1592 = vmatpush1.msra.mxu0 %v1520
  %1593 = vmatprep.subr.mxu0 %v1519
  %1594 = vmatpush1.msra.mxu0 %v1518
  %1595 = vmatprep.subr.mxu0 %v1517
  %1596 = vmatpush1.msra.mxu0 %v1516
  %1597 = vmatprep.subr.mxu0 %v1515
  %1598 = vmatpush1.msra.mxu0 %v1514
  %1599 = vmatprep.subr.mxu0 %v1513
  %1600 = vmatpush1.msra.mxu0 %v1512
  %1601 = vmatprep.subr.mxu0 %v1511
  %1602 = vmatpush1.msra.mxu0 %v1510
  %1603 = vmatprep.subr.mxu0 %v1509
  %1604 = vmatpush1.msra.mxu0 %v1508
  %1605 = vmatprep.subr.mxu0 %v1507
  %1606 = vmatpush1.msra.mxu0 %v1506
  %1607 = vmatprep.subr.mxu0 %v1505
  %1608 = vmatpush1.msra.mxu0 %v1504
  %1609 = vmatprep.subr.mxu0 %v1503
  %1610 = vmatpush1.msra.mxu0 %v1502
  %1611 = vmatprep.subr.mxu0 %v1565
  %1612 = vmatpush2.msra.mxu0 %v1564
  %1613 = vmatprep.subr.mxu0 %v1563
  %1614 = vmatpush2.msra.mxu0 %v1562
  %1615 = vmatprep.subr.mxu0 %v1561
  %1616 = vmatpush2.msra.mxu0 %v1560
  %1617 = vmatprep.subr.mxu0 %v1559
  %1618 = vmatpush2.msra.mxu0 %v1558
  %1619 = vmatprep.subr.mxu0 %v1557
  %1620 = vmatpush2.msra.mxu0 %v1556
  %1621 = vmatprep.subr.mxu0 %v1555
  %1622 = vmatpush2.msra.mxu0 %v1554
  %1623 = vmatprep.subr.mxu0 %v1553
  %1624 = vmatpush2.msra.mxu0 %v1552
  %1625 = vmatprep.subr.mxu0 %v1551
  %1626 = vmatpush2.msra.mxu0 %v1550
  %1627 = vmatprep.subr.mxu0 %v1549
  %1628 = vmatpush2.msra.mxu0 %v1548
  %1629 = vmatprep.subr.mxu0 %v1547
  %1630 = vmatpush2.msra.mxu0 %v1546
  %1631 = vmatprep.subr.mxu0 %v1545
  %1632 = vmatpush2.msra.mxu0 %v1544
  %1633 = vmatprep.subr.mxu0 %v1543
  %1634 = vmatpush2.msra.mxu0 %v1542
  %1635 = vmatprep.subr.mxu0 %v1541
  %1636 = vmatpush2.msra.mxu0 %v1540
  %1637 = vmatprep.subr.mxu0 %v1539
  %1638 = vmatpush2.msra.mxu0 %v1538
  %1639 = vmatprep.subr.mxu0 %v1537
  %1640 = vmatpush2.msra.mxu0 %v1536
  %1641 = vmatprep.subr.mxu0 %v1535
  %1642 = vmatpush2.msra.mxu0 %v1534
  %1643 = vmatprep.mubr.f32.mxu0 %v1500
  %1644 = vmatmul.mubr.f32.gmra.mxu0 %v1499
  %v1645 = vpop.f32.mrf.mxu0
  %v1646 = vadd.f32 %v1572, %v1645
  %v1647 = vpop.f32.mrf.mxu0
  %v1648 = vadd.f32 %v1576, %v1647
  %1649 = vdwg.mxu0
  %v1650 = vmax.f32 %v1646, 0.0
  %v1651 = vmax.f32 %v1648, 0.0
  %v1652 = vld [vmem:[%s5] sm:$0xff]
  %v1653 = vld [vmem:[%s5 + $0x8] sm:$0xff]
  %v1654 = vld [vmem:[%s5 + $0x10] sm:$0xff]
  %v1655 = vld [vmem:[%s5 + $0x18] sm:$0xff]
  %v1656 = vld [vmem:[%s5 + $0x20] sm:$0xff]
  %v1657 = vld [vmem:[%s5 + $0x28] sm:$0xff]
  %v1658 = vld [vmem:[%s5 + $0x30] sm:$0xff]
  %v1659 = vld [vmem:[%s5 + $0x38] sm:$0xff]
  %v1660 = vld [vmem:[%s5 + $0x40] sm:$0xff]
  %v1661 = vld [vmem:[%s5 + $0x48] sm:$0xff]
  %v1662 = vld [vmem:[%s5 + $0x50] sm:$0xff]
  %v1663 = vld [vmem:[%s5 + $0x58] sm:$0xff]
  %v1664 = vld [vmem:[%s5 + $0x60] sm:$0xff]
  %v1665 = vld [vmem:[%s5 + $0x68] sm:$0xff]
  %v1666 = vld [vmem:[%s5 + $0x70] sm:$0xff]
  %v1667 = vld [vmem:[%s5 + $0x78] sm:$0xff]
  %v1668 = vld [vmem:[%s5 + $0x80] sm:$0xff]
  %v1669 = vld [vmem:[%s5 + $0x88] sm:$0xff]
  %v1670 = vld [vmem:[%s5 + $0x90] sm:$0xff]
  %v1671 = vld [vmem:[%s5 + $0x98] sm:$0xff]
  %v1672 = vld [vmem:[%s5 + $0xa0] sm:$0xff]
  %v1673 = vld [vmem:[%s5 + $0xa8] sm:$0xff]
  %v1674 = vld [vmem:[%s5 + $0xb0] sm:$0xff]
  %v1675 = vld [vmem:[%s5 + $0xb8] sm:$0xff]
  %v1676 = vld [vmem:[%s5 + $0xc0] sm:$0xff]
  %v1677 = vld [vmem:[%s5 + $0xc8] sm:$0xff]
  %v1678 = vld [vmem:[%s5 + $0xd0] sm:$0xff]
  %v1679 = vld [vmem:[%s5 + $0xd8] sm:$0xff]
  %v1680 = vld [vmem:[%s5 + $0xe0] sm:$0xff]
  %v1681 = vld [vmem:[%s5 + $0xe8] sm:$0xff]
  %v1682 = vld [vmem:[%s5 + $0xf0] sm:$0xff]
  %v1683 = vld [vmem:[%s5 + $0xf8] sm:$0xff]
  %v1684 = vld [vmem:[%s6] sm:$0x1]
  %v1686 = vlaneseq
  %v1687 = vshrl.u32 %v1686, 7
  %v1688 = vsub.s32 0, %v1687
  %v1689 = vrot.slane %v1684, %v1688
  %1691 = vmatprep.subr.mxu0 0.0
  %1692 = vmatpush1.msra.mxu0 %v1667
  %1693 = vmatprep.subr.mxu0 0.0
  %1694 = vmatpush1.msra.mxu0 %v1666
  %1695 = vmatprep.subr.mxu0 0.0
  %1696 = vmatpush1.msra.mxu0 %v1665
  %1697 = vmatprep.subr.mxu0 0.0
  %1698 = vmatpush1.msra.mxu0 %v1664
  %1699 = vmatprep.subr.mxu0 0.0
  %1700 = vmatpush1.msra.mxu0 %v1663
  %1701 = vmatprep.subr.mxu0 0.0
  %1702 = vmatpush1.msra.mxu0 %v1662
  %1703 = vmatprep.subr.mxu0 0.0
  %1704 = vmatpush1.msra.mxu0 %v1661
  %1705 = vmatprep.subr.mxu0 0.0
  %1706 = vmatpush1.msra.mxu0 %v1660
  %1707 = vmatprep.subr.mxu0 0.0
  %1708 = vmatpush1.msra.mxu0 %v1659
  %1709 = vmatprep.subr.mxu0 0.0
  %1710 = vmatpush1.msra.mxu0 %v1658
  %1711 = vmatprep.subr.mxu0 0.0
  %1712 = vmatpush1.msra.mxu0 %v1657
  %1713 = vmatprep.subr.mxu0 0.0
  %1714 = vmatpush1.msra.mxu0 %v1656
  %1715 = vmatprep.subr.mxu0 0.0
  %1716 = vmatpush1.msra.mxu0 %v1655
  %1717 = vmatprep.subr.mxu0 0.0
  %1718 = vmatpush1.msra.mxu0 %v1654
  %1719 = vmatprep.subr.mxu0 0.0
  %1720 = vmatpush1.msra.mxu0 %v1653
  %1721 = vmatprep.subr.mxu0 0.0
  %1722 = vmatpush1.msra.mxu0 %v1652
  %1723 = vmatprep.subr.mxu0 0.0
  %1724 = vmatpush2.msra.mxu0 %v1683
  %1725 = vmatprep.subr.mxu0 0.0
  %1726 = vmatpush2.msra.mxu0 %v1682
  %1727 = vmatprep.subr.mxu0 0.0
  %1728 = vmatpush2.msra.mxu0 %v1681
  %1729 = vmatprep.subr.mxu0 0.0
  %1730 = vmatpush2.msra.mxu0 %v1680
  %1731 = vmatprep.subr.mxu0 0.0
  %1732 = vmatpush2.msra.mxu0 %v1679
  %1733 = vmatprep.subr.mxu0 0.0
  %1734 = vmatpush2.msra.mxu0 %v1678
  %1735 = vmatprep.subr.mxu0 0.0
  %1736 = vmatpush2.msra.mxu0 %v1677
  %1737 = vmatprep.subr.mxu0 0.0
  %1738 = vmatpush2.msra.mxu0 %v1676
  %1739 = vmatprep.subr.mxu0 0.0
  %1740 = vmatpush2.msra.mxu0 %v1675
  %1741 = vmatprep.subr.mxu0 0.0
  %1742 = vmatpush2.msra.mxu0 %v1674
  %1743 = vmatprep.subr.mxu0 0.0
  %1744 = vmatpush2.msra.mxu0 %v1673
  %1745 = vmatprep.subr.mxu0 0.0
  %1746 = vmatpush2.msra.mxu0 %v1672
  %1747 = vmatprep.subr.mxu0 0.0
  %1748 = vmatpush2.msra.mxu0 %v1671
  %1749 = vmatprep.subr.mxu0 0.0
  %1750 = vmatpush2.msra.mxu0 %v1670
  %1751 = vmatprep.subr.mxu0 0.0
  %1752 = vmatpush2.msra.mxu0 %v1669
  %1753 = vmatprep.subr.mxu0 0.0
  %1754 = vmatpush2.msra.mxu0 %v1668
  %1755 = vmatprep.mubr.f32.mxu0 %v1651
  %1756 = vmatmul.mubr.f32.gmra.mxu0 %v1650
  %v1757 = vpop.f32.mrf.mxu0
  %v1758 = vadd.f32 %v1689, %v1757
  %v1759 = vpop.f32.mrf.mxu0
  %1760 = vdwg.mxu0
  %v1761 = vsub.f32 0.0, %v1758
  %v1762 = vmul.f32 %v1761, 1.442695
  %v1763 = vpow.pop %v1762
  %v1764 = vadd.f32 %v1763, 1.0
  %v1765 = vrcp.pop %v1764
  %1766 = vst [vmem:[%s7] sm:$0xff] %v1765
  // Predicated region
  $region30: #{mlp_forward.1} parent=0 // pred_check
    _
  $region31: #{mlp_forward.1} parent=0 // pred_check_branch
    %1768 = sbr.rel (0) target = $region33
  $region32: #{mlp_forward.1} parent=0 // pred_region
    _
  $region33: #{mlp_forward.1} parent=0 // pred_fallthru
    _
  // Predicated region
  $region34: #{mlp_forward.1} parent=0 // pred_check
    _
  $region35: #{mlp_forward.1} parent=0 // pred_check_branch
    %1770 = sbr.rel (0) target = $region37
  $region36: #{mlp_forward.1} parent=0 // pred_region
    _
  $region37: #{mlp_forward.1} parent=0 // pred_fallthru
    _

</llo_original>
